<compile_context>
chip_gen: v6e
topology: v6e:2x2x1
jax: 0.10.0
libtpu: 0.0.40
codegen_flags: <defaults>
</compile_context>

<pallas_src>
import functools

import jax
import jax.numpy as jnp
from jax import lax
from jax.experimental import pallas as pl
from jax.experimental.pallas import tpu as pltpu


def _round_up(x, m):
    return (x + m - 1) // m * m


def _pad2(x, rows, cols):
    pr, pc = rows - x.shape[0], cols - x.shape[1]
    if pr == 0 and pc == 0:
        return x
    return jnp.pad(x, ((0, pr), (0, pc)))


# ----------------------------------------------------------------------------
# Pass 1: aggregation (tiled over K) + MLP + masked BN partial statistics
# ----------------------------------------------------------------------------
def _gnn_pass1_kernel(adj_ref, invdeg_ref, h_ref, w1_ref, b1_ref, w2_ref,
                      b2_ref, *rest, n_real, tm, tk, residual, h_resident,
                      compute_dtype):
    if residual:
        hagg_ref, z_ref, psum_ref, psumsq_ref, acc_ref = rest
    else:
        z_ref, psum_ref, psumsq_ref, acc_ref = rest
        hagg_ref = None

    # IMPORTANT: all program_id / num_programs calls live at the kernel top
    # level (never inside a pl.when body), so they are always substituted.
    i = pl.program_id(0)
    k = pl.program_id(1)
    k_last = pl.num_programs(1) - 1
    row_base = i * tm

    @pl.when(k == 0)
    def _init():
        acc_ref[...] = jnp.zeros_like(acc_ref)

    # Partial aggregation over this K (src-node) tile: acc += adj_tile @ h_tile
    if h_resident:
        h_blk = h_ref[pl.ds(k * tk, tk), :]      # h fully resident in VMEM
    else:
        h_blk = h_ref[...]
    acc_ref[...] += jnp.dot(adj_ref[...], h_blk,
                            preferred_element_type=jnp.float32)

    @pl.when(k == k_last)
    def _epilogue():
        # --- mean aggregation via exact, host-precomputed 1/deg ---
        h_agg = acc_ref[...] * invdeg_ref[...]               # (tm, f_in_p) f32

        # --- relu(linear1), relu(linear2); f32 accumulation ---
        z = jnp.dot(h_agg.astype(compute_dtype), w1_ref[...],
                    preferred_element_type=jnp.float32) + b1_ref[...]
        z = jnp.maximum(z, 0.0)
        z = jnp.dot(z.astype(compute_dtype), w2_ref[...],
                    preferred_element_type=jnp.float32) + b2_ref[...]
        z = jnp.maximum(z, 0.0)

        if residual:
            hagg_ref[...] = h_agg
        z_ref[...] = z

        # --- masked per-tile BN partials (exclude padded rows) ---
        row = row_base + lax.broadcasted_iota(jnp.int32, (tm, 1), 0)
        valid = (row < n_real).astype(jnp.float32)           # (tm, 1)
        zm = z * valid
        part_sum = jnp.sum(zm, axis=0, keepdims=True)        # (1, f_out_p)
        part_sumsq = jnp.sum(zm * z, axis=0, keepdims=True)  # (1, f_out_p)
        sub = lax.broadcasted_iota(jnp.int32, (8, 1), 0)
        psum_ref[...] = jnp.where(sub == 0, part_sum, 0.0)   # (8, f_out_p)
        psumsq_ref[...] = jnp.where(sub == 0, part_sumsq, 0.0)


# ----------------------------------------------------------------------------
# Pass 2: streaming fused BatchNorm affine + residual
# ----------------------------------------------------------------------------
def _gnn_pass2_kernel(*refs, residual):
    if residual:
        z_ref, hagg_ref, scale_ref, shift_ref, out_ref = refs
    else:
        z_ref, scale_ref, shift_ref, out_ref = refs
        hagg_ref = None
    out = z_ref[...] * scale_ref[...] + shift_ref[...]
    if residual:
        out = out + hagg_ref[...]
    out_ref[...] = out


# ----------------------------------------------------------------------------
# Wrapper
# ----------------------------------------------------------------------------
def gnn_layer(adj, deg, h, w1, b1, w2, b2, gamma, beta, *,
              eps=1e-5, tm=256, tk=512, compute_dtype=jnp.float32):
    """GNNLayer forward.  adj: [N,N] (adj[dst,src]=e), deg: [N,1] in-degree,
    h: [N,Fin], Linear weights stored as [in,out].  Returns [N,Fout] float32.

    compute_dtype=jnp.bfloat16 halves the dominant O(N^2) adjacency HBM stream
    and hits the 256x256 bf16 MXU on v6e/v7x; f32 accumulation is kept.
    """
    n, f_in = h.shape
    f_out = w1.shape[1]
    residual = (f_in == f_out)
    f32 = jnp.float32
    item = jnp.dtype(compute_dtype).itemsize

    f_in_p = _round_up(f_in, 128)      # lane-dense feature padding
    f_out_p = _round_up(f_out, 128)
    n128 = _round_up(n, 128)

    # dst-row tile: as large as requested (HBM roofline), but keep >= 2 row
    # tiles when possible so the "parallel" axis feeds both v7x TensorCores.
    tm = _round_up(max(tm, 8), 128)
    tm = min(tm, n128)
    if n128 >= 256:
        tm = min(tm, max(128, _round_up(n128 // 2, 128)))
    # src (contraction) tile
    tk = _round_up(max(tk, 8), 128)
    tk = min(tk, n128)

    n_m = _round_up(n, tm)
    n_k = _round_up(n, tk)
    n_row_tiles = n_m // tm
    n_k_tiles = n_k // tk

    # Keep node features fully VMEM-resident when small: removes the
    # per-row-tile re-streaming of h (up to ~2x fewer HBM bytes).
    h_resident = (n_k * f_in_p * item) <= (4 * 1024 * 1024)

    adj_p = _pad2(adj.astype(f32), n_m, n_k).astype(compute_dtype)
    h_p = _pad2(h.astype(f32), n_k, f_in_p).astype(compute_dtype)
    deg2 = deg.reshape(n, 1).astype(f32)
    invdeg_p = _pad2(jnp.where(deg2 > 0.0, 1.0 / deg2, 0.0), n_m, 1)  # exact
    w1_p = _pad2(w1.astype(f32), f_in_p, f_out_p).astype(compute_dtype)
    w2_p = _pad2(w2.astype(f32), f_out_p, f_out_p).astype(compute_dtype)
    b1_p = _pad2(b1.reshape(1, f_out).astype(f32), 1, f_out_p)
    b2_p = _pad2(b2.reshape(1, f_out).astype(f32), 1, f_out_p)
    gamma_p = _pad2(gamma.reshape(1, f_out).astype(f32), 1, f_out_p)
    beta_p = _pad2(beta.reshape(1, f_out).astype(f32), 1, f_out_p)

    # ---------------- pass 1 ----------------
    if h_resident:
        h_spec = pl.BlockSpec((n_k, f_in_p), lambda i, k: (0, 0))
    else:
        h_spec = pl.BlockSpec((tk, f_in_p), lambda i, k: (k, 0))

    out_shapes, out_specs = [], []
    if residual:   # only pay the h_agg HBM write when the residual needs it
        out_shapes.append(jax.ShapeDtypeStruct((n_m, f_in_p), jnp.float32))
        out_specs.append(pl.BlockSpec((tm, f_in_p), lambda i, k: (i, 0)))
    out_shapes += [
        jax.ShapeDtypeStruct((n_m, f_out_p), jnp.float32),              # z pre-BN
        jax.ShapeDtypeStruct((n_row_tiles * 8, f_out_p), jnp.float32),  # sum
        jax.ShapeDtypeStruct((n_row_tiles * 8, f_out_p), jnp.float32),  # sumsq
    ]
    out_specs += [
        pl.BlockSpec((tm, f_out_p), lambda i, k: (i, 0)),
        pl.BlockSpec((8, f_out_p), lambda i, k: (i, 0)),
        pl.BlockSpec((8, f_out_p), lambda i, k: (i, 0)),
    ]

    h_bytes = (n_k * f_in_p if h_resident else n_row_tiles * n_k * f_in_p) * item
    flops1 = (2 * n_m * n_k * f_in_p
              + 2 * n_m * f_in_p * f_out_p + 2 * n_m * f_out_p * f_out_p)
    bytes1 = (item * (n_m * n_k + f_in_p * f_out_p + f_out_p * f_out_p)
              + h_bytes + 4 * (n_m + 4 * f_out_p)
              + 4 * (n_m * f_out_p + (n_m * f_in_p if residual else 0)
                     + 2 * n_row_tiles * 8 * f_out_p))

    pass1 = pl.pallas_call(
        functools.partial(_gnn_pass1_kernel, n_real=n, tm=tm, tk=tk,
                          residual=residual, h_resident=h_resident,
                          compute_dtype=compute_dtype),
        out_shape=tuple(out_shapes),
        grid_spec=pltpu.PrefetchScalarGridSpec(
            num_scalar_prefetch=0,
            grid=(n_row_tiles, n_k_tiles),
            in_specs=[
                pl.BlockSpec((tm, tk), lambda i, k: (i, k)),            # adj
                pl.BlockSpec((tm, 1), lambda i, k: (i, 0)),             # 1/deg
                h_spec,                                                  # h
                pl.BlockSpec((f_in_p, f_out_p), lambda i, k: (0, 0)),   # w1
                pl.BlockSpec((1, f_out_p), lambda i, k: (0, 0)),        # b1
                pl.BlockSpec((f_out_p, f_out_p), lambda i, k: (0, 0)),  # w2
                pl.BlockSpec((1, f_out_p), lambda i, k: (0, 0)),        # b2
            ],
            out_specs=out_specs,
            scratch_shapes=[pltpu.VMEM((tm, f_in_p), jnp.float32)],
        ),
        compiler_params=pltpu.CompilerParams(
            dimension_semantics=("parallel", "arbitrary"),
            vmem_limit_bytes=48 * 1024 * 1024),   # v7x-safe (< 64 MiB physical)
        cost_estimate=pl.CostEstimate(flops=int(flops1), transcendentals=0,
                                      bytes_accessed=int(bytes1)),
    )
    if residual:
        h_agg, z_pre, psum, psumsq = pass1(adj_p, invdeg_p, h_p,
                                           w1_p, b1_p, w2_p, b2_p)
    else:
        z_pre, psum, psumsq = pass1(adj_p, invdeg_p, h_p,
                                    w1_p, b1_p, w2_p, b2_p)
        h_agg = None

    # ---- global BN statistics: tiny, computed once in plain XLA ----
    total = jnp.sum(psum, axis=0, keepdims=True)              # (1, f_out_p)
    total_sq = jnp.sum(psumsq, axis=0, keepdims=True)
    inv_n = jnp.float32(1.0 / n)
    mean = total * inv_n
    var = jnp.maximum(total_sq * inv_n - mean * mean, 0.0)    # biased (training BN)
    scale = gamma_p * lax.rsqrt(var + eps)                    # fused affine
    shift = beta_p - mean * scale

    # ---------------- pass 2 ----------------
    in_arrays = [z_pre] + ([h_agg] if residual else []) + [scale, shift]
    in_specs = [pl.BlockSpec((tm, f_out_p), lambda i: (i, 0))]
    if residual:
        in_specs.append(pl.BlockSpec((tm, f_in_p), lambda i: (i, 0)))
    in_specs += [pl.BlockSpec((1, f_out_p), lambda i: (0, 0)),
                 pl.BlockSpec((1, f_out_p), lambda i: (0, 0))]
    flops2 = 3 * n_m * f_out_p
    bytes2 = 4 * (2 * n_m * f_out_p + (n_m * f_in_p if residual else 0)
                  + 2 * f_out_p)

    pass2 = pl.pallas_call(
        functools.partial(_gnn_pass2_kernel, residual=residual),
        out_shape=jax.ShapeDtypeStruct((n_m, f_out_p), jnp.float32),
        grid_spec=pltpu.PrefetchScalarGridSpec(
            num_scalar_prefetch=0,
            grid=(n_row_tiles,),
            in_specs=in_specs,
            out_specs=pl.BlockSpec((tm, f_out_p), lambda i: (i, 0)),
        ),
        input_output_aliases={0: 0},     # output reuses the z_pre buffer
        compiler_params=pltpu.CompilerParams(
            dimension_semantics=("parallel",),
            vmem_limit_bytes=48 * 1024 * 1024),
        cost_estimate=pl.CostEstimate(flops=int(flops2), transcendentals=0,
                                      bytes_accessed=int(bytes2)),
    )
    out_p = pass2(*in_arrays)
    return out_p[:n, :f_out]


# ----------------------------------------------------------------------------
# Pure-JAX reference (exact semantics of the PyTorch forward, training-mode BN)
# ----------------------------------------------------------------------------
def _reference(adj, deg, h, w1, b1, w2, b2, gamma, beta, eps=1e-5):
    mm = functools.partial(jnp.dot, precision=jax.lax.Precision.HIGHEST)
    agg = mm(adj, h)
    h_agg = jnp.where(deg > 0.0, agg / deg, 0.0)
    z = jax.nn.relu(mm(h_agg, w1) + b1)
    z = jax.nn.relu(mm(z, w2) + b2)
    mean = jnp.mean(z, axis=0, keepdims=True)
    var = jnp.mean((z - mean) ** 2, axis=0, keepdims=True)   # biased (training BN)
    z = (z - mean) / jnp.sqrt(var + eps) * gamma + beta
    if h.shape[1] == w1.shape[1]:
        z = z + h_agg                                         # residual (post-agg)
    return z


if __name__ == "__main__":
    key = jax.random.PRNGKey(0)
    k_mask, k_e, k_h, k_w1, k_b1, k_w2, k_b2 = jax.random.split(key, 7)

    # Small but non-aligned shapes: exercises row/feature padding + masking.
    N = 200          # number of nodes
    IN_FEATS = 96    # in_feats  (padded to 128 lanes)
    OUT_FEATS = 96   # out_feats == in_feats -> residual branch active

    # --- random graph (dense representation), self-loops so indegree >= 1 ---
    mask = (jax.random.uniform(k_mask, (N, N)) < 0.1).astype(jnp.float32)
    mask = jnp.maximum(mask, jnp.eye(N, dtype=jnp.float32))
    e_vals = jax.random.normal(k_e, (N, N), dtype=jnp.float32)
    adj = mask * e_vals                                # adj[dst, src] = edge value e
    deg = jnp.sum(mask, axis=1, keepdims=True)         # in-degree per dst, [N, 1]

    # --- node features & parameters (Linear stored as [in, out]) ---
    h = jax.random.normal(k_h, (N, IN_FEATS), dtype=jnp.float32)
    w1 = jax.random.normal(k_w1, (IN_FEATS, OUT_FEATS), dtype=jnp.float32) * 0.1
    b1 = jax.random.normal(k_b1, (1, OUT_FEATS), dtype=jnp.float32) * 0.1
    w2 = jax.random.normal(k_w2, (OUT_FEATS, OUT_FEATS), dtype=jnp.float32) * 0.1
    b2 = jax.random.normal(k_b2, (1, OUT_FEATS), dtype=jnp.float32) * 0.1
    gamma = jnp.ones((1, OUT_FEATS), dtype=jnp.float32)   # BatchNorm1d weight
    beta = jnp.zeros((1, OUT_FEATS), dtype=jnp.float32)   # BatchNorm1d bias

    # f32 compute for exact parity with the reference; pass
    # compute_dtype=jnp.bfloat16 to hit the bf16 MXU / half HBM on v6e/v7x.
    out = gnn_layer(adj, deg, h, w1, b1, w2, b2, gamma, beta,
                    compute_dtype=jnp.float32)
    jax.block_until_ready(out)

    assert out.shape == (N, OUT_FEATS)
    ref = _reference(adj, deg, h, w1, b1, w2, b2, gamma, beta)
    max_err = float(jnp.max(jnp.abs(out - ref)))
    assert max_err < 1e-2, f"mismatch vs reference: max abs err = {max_err}"
    print("KERNEL_OK")
</pallas_src>

<mosaic_0001>
module attributes {stable_mosaic.version = 11 : i64} {
  func.func @_gnn_pass1_kernel(%arg0: i32, %arg1: i32, %arg2: memref<128x256xf32, #tpu.memory_space<vmem>>, %arg3: memref<128x1xf32, #tpu.memory_space<vmem>>, %arg4: memref<256x128xf32, #tpu.memory_space<vmem>>, %arg5: memref<128x128xf32, #tpu.memory_space<vmem>>, %arg6: memref<1x128xf32, #tpu.memory_space<vmem>>, %arg7: memref<128x128xf32, #tpu.memory_space<vmem>>, %arg8: memref<1x128xf32, #tpu.memory_space<vmem>>, %arg9: memref<128x128xf32, #tpu.memory_space<vmem>>, %arg10: memref<128x128xf32, #tpu.memory_space<vmem>>, %arg11: memref<8x128xf32, #tpu.memory_space<vmem>>, %arg12: memref<8x128xf32, #tpu.memory_space<vmem>>, %arg13: memref<128x128xf32, #tpu.memory_space<vmem>>) attributes {dimension_semantics = [#tpu.dimension_semantics<parallel>, #tpu.dimension_semantics<arbitrary>], iteration_bounds = array<i64: 2, 1>, scalar_prefetch = 0 : i64, scratch_operands = 1 : i64, tpu.core_type = #tpu.core_type<tc>, window_params = [{transform_indices = @transform_0, window_bounds = array<i64: 128, 256>}, {transform_indices = @transform_1, window_bounds = array<i64: 128, 1>}, {pipeline_mode = #tpu.pipeline_mode<synchronous>, transform_indices = @transform_2, window_bounds = array<i64: 256, 128>}, {pipeline_mode = #tpu.pipeline_mode<synchronous>, transform_indices = @transform_3, window_bounds = array<i64: 128, 128>}, {pipeline_mode = #tpu.pipeline_mode<synchronous>, transform_indices = @transform_4, window_bounds = array<i64: 1, 128>}, {pipeline_mode = #tpu.pipeline_mode<synchronous>, transform_indices = @transform_5, window_bounds = array<i64: 128, 128>}, {pipeline_mode = #tpu.pipeline_mode<synchronous>, transform_indices = @transform_6, window_bounds = array<i64: 1, 128>}, {transform_indices = @transform_7, window_bounds = array<i64: 128, 128>}, {transform_indices = @transform_8, window_bounds = array<i64: 128, 128>}, {transform_indices = @transform_9, window_bounds = array<i64: 8, 128>}, {transform_indices = @transform_10, window_bounds = array<i64: 8, 128>}]} {
    %c128_i32 = arith.constant 128 : i32
    %0 = arith.muli %arg0, %c128_i32 : i32
    %c0_i32 = arith.constant 0 : i32
    %1 = arith.cmpi eq, %arg1, %c0_i32 : i32
    %2 = arith.extui %1 : i1 to i32
    %c0_i32_0 = arith.constant 0 : i32
    %3 = arith.cmpi ne, %2, %c0_i32_0 : i32
    scf.if %3 {
      %cst_9 = arith.constant 0.000000e+00 : f32
      %15 = vector.broadcast %cst_9 : f32 to vector<128x128xf32>
      %c0_10 = arith.constant 0 : index
      %c0_11 = arith.constant 0 : index
      %16 = vector.load %arg13[%c0_10, %c0_11] : memref<128x128xf32, #tpu.memory_space<vmem>>, vector<128x128xf32>
      tpu.vector_store %arg13[%c0_10, %c0_11], %15 {strides = array<i32>} : memref<128x128xf32, #tpu.memory_space<vmem>>, vector<128x128xf32>,
    } else {
    }
    %c256_i32 = arith.constant 256 : i32
    %4 = arith.muli %arg1, %c256_i32 : i32
    %5 = arith.index_cast %4 : i32 to index
    %c0 = arith.constant 0 : index
    %6 = vector.load %arg4[%5, %c0] : memref<256x128xf32, #tpu.memory_space<vmem>>, vector<256x128xf32>
    %c0_1 = arith.constant 0 : index
    %c0_2 = arith.constant 0 : index
    %7 = vector.load %arg13[%c0_1, %c0_2] : memref<128x128xf32, #tpu.memory_space<vmem>>, vector<128x128xf32>
    %c0_3 = arith.constant 0 : index
    %c0_4 = arith.constant 0 : index
    %8 = vector.load %arg2[%c0_3, %c0_4] : memref<128x256xf32, #tpu.memory_space<vmem>>, vector<128x256xf32>
    %cst = arith.constant dense<0.000000e+00> : vector<128x128xf32>
    %9 = tpu.matmul %8, %6, %cst {dimension_numbers = #tpu.dot_dimension_numbers<[1], [0], [0], [1], [0, 0, 1, 1], [], []>} : vector<128x256xf32>, vector<256x128xf32>, vector<128x128xf32> -> vector<128x128xf32>
    %10 = arith.addf %7, %9 : vector<128x128xf32>
    %c0_5 = arith.constant 0 : index
    %c0_6 = arith.constant 0 : index
    %11 = vector.load %arg13[%c0_5, %c0_6] : memref<128x128xf32, #tpu.memory_space<vmem>>, vector<128x128xf32>
    tpu.vector_store %arg13[%c0_5, %c0_6], %10 {strides = array<i32>} : memref<128x128xf32, #tpu.memory_space<vmem>>, vector<128x128xf32>,
    %c0_i32_7 = arith.constant 0 : i32
    %12 = arith.cmpi eq, %arg1, %c0_i32_7 : i32
    %13 = arith.extui %12 : i1 to i32
    %c0_i32_8 = arith.constant 0 : i32
    %14 = arith.cmpi ne, %13, %c0_i32_8 : i32
    scf.if %14 {
      %c0_9 = arith.constant 0 : index
      %c0_10 = arith.constant 0 : index
      %15 = vector.load %arg13[%c0_9, %c0_10] : memref<128x128xf32, #tpu.memory_space<vmem>>, vector<128x128xf32>
      %c0_11 = arith.constant 0 : index
      %c0_12 = arith.constant 0 : index
      %16 = vector.load %arg3[%c0_11, %c0_12] : memref<128x1xf32, #tpu.memory_space<vmem>>, vector<128x1xf32>
      %17 = vector.broadcast %16 : vector<128x1xf32> to vector<128x128xf32>
      %18 = arith.mulf %15, %17 : vector<128x128xf32>
      %c0_13 = arith.constant 0 : index
      %c0_14 = arith.constant 0 : index
      %19 = vector.load %arg5[%c0_13, %c0_14] : memref<128x128xf32, #tpu.memory_space<vmem>>, vector<128x128xf32>
      %cst_15 = arith.constant dense<0.000000e+00> : vector<128x128xf32>
      %20 = tpu.matmul %18, %19, %cst_15 {dimension_numbers = #tpu.dot_dimension_numbers<[1], [0], [0], [1], [0, 0, 1, 1], [], []>} : vector<128x128xf32>, vector<128x128xf32>, vector<128x128xf32> -> vector<128x128xf32>
      %c0_16 = arith.constant 0 : index
      %c0_17 = arith.constant 0 : index
      %21 = vector.load %arg6[%c0_16, %c0_17] : memref<1x128xf32, #tpu.memory_space<vmem>>, vector<1x128xf32>
      %22 = vector.broadcast %21 : vector<1x128xf32> to vector<128x128xf32>
      %23 = arith.addf %20, %22 : vector<128x128xf32>
      %cst_18 = arith.constant 0.000000e+00 : f32
      %24 = vector.broadcast %cst_18 : f32 to vector<128x128xf32>
      %25 = arith.maximumf %23, %24 : vector<128x128xf32>
      %c0_19 = arith.constant 0 : index
      %c0_20 = arith.constant 0 : index
      %26 = vector.load %arg7[%c0_19, %c0_20] : memref<128x128xf32, #tpu.memory_space<vmem>>, vector<128x128xf32>
      %cst_21 = arith.constant dense<0.000000e+00> : vector<128x128xf32>
      %27 = tpu.matmul %25, %26, %cst_21 {dimension_numbers = #tpu.dot_dimension_numbers<[1], [0], [0], [1], [0, 0, 1, 1], [], []>} : vector<128x128xf32>, vector<128x128xf32>, vector<128x128xf32> -> vector<128x128xf32>
      %c0_22 = arith.constant 0 : index
      %c0_23 = arith.constant 0 : index
      %28 = vector.load %arg8[%c0_22, %c0_23] : memref<1x128xf32, #tpu.memory_space<vmem>>, vector<1x128xf32>
      %29 = vector.broadcast %28 : vector<1x128xf32> to vector<128x128xf32>
      %30 = arith.addf %27, %29 : vector<128x128xf32>
      %cst_24 = arith.constant 0.000000e+00 : f32
      %31 = vector.broadcast %cst_24 : f32 to vector<128x128xf32>
      %32 = arith.maximumf %30, %31 : vector<128x128xf32>
      %c0_25 = arith.constant 0 : index
      %c0_26 = arith.constant 0 : index
      %33 = vector.load %arg9[%c0_25, %c0_26] : memref<128x128xf32, #tpu.memory_space<vmem>>, vector<128x128xf32>
      tpu.vector_store %arg9[%c0_25, %c0_26], %18 {strides = array<i32>} : memref<128x128xf32, #tpu.memory_space<vmem>>, vector<128x128xf32>,
      %c0_27 = arith.constant 0 : index
      %c0_28 = arith.constant 0 : index
      %34 = vector.load %arg10[%c0_27, %c0_28] : memref<128x128xf32, #tpu.memory_space<vmem>>, vector<128x128xf32>
      tpu.vector_store %arg10[%c0_27, %c0_28], %32 {strides = array<i32>} : memref<128x128xf32, #tpu.memory_space<vmem>>, vector<128x128xf32>,
      %35 = tpu.iota {dimensions = array<i32: 0>} : vector<128x1xi32>
      %36 = vector.broadcast %0 : i32 to vector<128x1xi32>
      %37 = arith.addi %36, %35 : vector<128x1xi32>
      %c200_i32 = arith.constant 200 : i32
      %38 = vector.broadcast %c200_i32 : i32 to vector<128x1xi32>
      %39 = arith.cmpi slt, %37, %38 : vector<128x1xi32>
      %40 = arith.extui %39 : vector<128x1xi1> to vector<128x1xi32>
      %41 = arith.sitofp %40 : vector<128x1xi32> to vector<128x1xf32>
      %42 = vector.broadcast %41 : vector<128x1xf32> to vector<128x128xf32>
      %43 = arith.mulf %32, %42 : vector<128x128xf32>
      %cst_29 = arith.constant dense<0.000000e+00> : vector<128xf32>
      %44 = vector.multi_reduction <add>, %43, %cst_29 [0] : vector<128x128xf32> to vector<128xf32>
      %45 = vector.shape_cast %44 : vector<128xf32> to vector<1x128xf32>
      %46 = arith.mulf %43, %32 : vector<128x128xf32>
      %cst_30 = arith.constant dense<0.000000e+00> : vector<128xf32>
      %47 = vector.multi_reduction <add>, %46, %cst_30 [0] : vector<128x128xf32> to vector<128xf32>
      %48 = vector.shape_cast %47 : vector<128xf32> to vector<1x128xf32>
      %49 = tpu.iota {dimensions = array<i32: 0>} : vector<8x1xi32>
      %c0_i32_31 = arith.constant 0 : i32
      %50 = vector.broadcast %c0_i32_31 : i32 to vector<8x1xi32>
      %51 = arith.cmpi eq, %49, %50 : vector<8x1xi32>
      %cst_32 = arith.constant 0.000000e+00 : f32
      %52 = vector.shape_cast %51 : vector<8x1xi1> to vector<8x1xi1>
      %53 = vector.broadcast %52 : vector<8x1xi1> to vector<8x128xi1>
      %54 = vector.shape_cast %45 : vector<1x128xf32> to vector<1x128xf32>
      %55 = vector.broadcast %54 : vector<1x128xf32> to vector<8x128xf32>
      %56 = vector.broadcast %cst_32 : f32 to vector<8x128xf32>
      %57 = arith.select %53, %55, %56 : vector<8x128xi1>, vector<8x128xf32>
      %c0_33 = arith.constant 0 : index
      %c0_34 = arith.constant 0 : index
      %58 = vector.load %arg11[%c0_33, %c0_34] : memref<8x128xf32, #tpu.memory_space<vmem>>, vector<8x128xf32>
      tpu.vector_store %arg11[%c0_33, %c0_34], %57 {strides = array<i32>} : memref<8x128xf32, #tpu.memory_space<vmem>>, vector<8x128xf32>,
      %c0_i32_35 = arith.constant 0 : i32
      %59 = vector.broadcast %c0_i32_35 : i32 to vector<8x1xi32>
      %60 = arith.cmpi eq, %49, %59 : vector<8x1xi32>
      %cst_36 = arith.constant 0.000000e+00 : f32
      %61 = vector.shape_cast %60 : vector<8x1xi1> to vector<8x1xi1>
      %62 = vector.broadcast %61 : vector<8x1xi1> to vector<8x128xi1>
      %63 = vector.shape_cast %48 : vector<1x128xf32> to vector<1x128xf32>
      %64 = vector.broadcast %63 : vector<1x128xf32> to vector<8x128xf32>
      %65 = vector.broadcast %cst_36 : f32 to vector<8x128xf32>
      %66 = arith.select %62, %64, %65 : vector<8x128xi1>, vector<8x128xf32>
      %c0_37 = arith.constant 0 : index
      %c0_38 = arith.constant 0 : index
      %67 = vector.load %arg12[%c0_37, %c0_38] : memref<8x128xf32, #tpu.memory_space<vmem>>, vector<8x128xf32>
      tpu.vector_store %arg12[%c0_37, %c0_38], %66 {strides = array<i32>} : memref<8x128xf32, #tpu.memory_space<vmem>>, vector<8x128xf32>,
    } else {
    }
    return
  }
  func.func @transform_0(%arg0: i32, %arg1: i32) -> (i32, i32) {
    %c0_i32 = arith.constant 0 : i32
    return %arg0, %arg1 : i32, i32
  }
  func.func @transform_1(%arg0: i32, %arg1: i32) -> (i32, i32) {
    %c0_i32 = arith.constant 0 : i32
    %c0_i32_0 = arith.constant 0 : i32
    return %arg0, %c0_i32 : i32, i32
  }
  func.func @transform_2(%arg0: i32, %arg1: i32) -> (i32, i32) {
    %c0_i32 = arith.constant 0 : i32
    %c0_i32_0 = arith.constant 0 : i32
    %c0_i32_1 = arith.constant 0 : i32
    return %c0_i32, %c0_i32_0 : i32, i32
  }
  func.func @transform_3(%arg0: i32, %arg1: i32) -> (i32, i32) {
    %c0_i32 = arith.constant 0 : i32
    %c0_i32_0 = arith.constant 0 : i32
    %c0_i32_1 = arith.constant 0 : i32
    return %c0_i32, %c0_i32_0 : i32, i32
  }
  func.func @transform_4(%arg0: i32, %arg1: i32) -> (i32, i32) {
    %c0_i32 = arith.constant 0 : i32
    %c0_i32_0 = arith.constant 0 : i32
    %c0_i32_1 = arith.constant 0 : i32
    return %c0_i32, %c0_i32_0 : i32, i32
  }
  func.func @transform_5(%arg0: i32, %arg1: i32) -> (i32, i32) {
    %c0_i32 = arith.constant 0 : i32
    %c0_i32_0 = arith.constant 0 : i32
    %c0_i32_1 = arith.constant 0 : i32
    return %c0_i32, %c0_i32_0 : i32, i32
  }
  func.func @transform_6(%arg0: i32, %arg1: i32) -> (i32, i32) {
    %c0_i32 = arith.constant 0 : i32
    %c0_i32_0 = arith.constant 0 : i32
    %c0_i32_1 = arith.constant 0 : i32
    return %c0_i32, %c0_i32_0 : i32, i32
  }
  func.func @transform_7(%arg0: i32, %arg1: i32) -> (i32, i32) {
    %c0_i32 = arith.constant 0 : i32
    %c0_i32_0 = arith.constant 0 : i32
    return %arg0, %c0_i32 : i32, i32
  }
  func.func @transform_8(%arg0: i32, %arg1: i32) -> (i32, i32) {
    %c0_i32 = arith.constant 0 : i32
    %c0_i32_0 = arith.constant 0 : i32
    return %arg0, %c0_i32 : i32, i32
  }
  func.func @transform_9(%arg0: i32, %arg1: i32) -> (i32, i32) {
    %c0_i32 = arith.constant 0 : i32
    %c0_i32_0 = arith.constant 0 : i32
    return %arg0, %c0_i32 : i32, i32
  }
  func.func @transform_10(%arg0: i32, %arg1: i32) -> (i32, i32) {
    %c0_i32 = arith.constant 0 : i32
    %c0_i32_0 = arith.constant 0 : i32
    return %arg0, %c0_i32 : i32, i32
  }
}

</mosaic_0001>

<llo_original>
// kernel: tpu_custom_call.1
$region0: #{tpu_custom_call.1}
  #allocation0 [shape = 'u32[]', space=smem, size = 0x4, offset = 0x4, fixed_abs, tag = 'smem constant byte address 0x4 - core index']
  #allocation1 [shape = 'u32[144,128]{1,0:T(1,128)}', space=vmem, size = 0x12000, scoped, tag = 'internal scratch']
  #allocation2 [shape = 'f32[128,128]{1,0:T(8,128)}', space=vmem, size = 0x10000, scoped, tag = 'scratch operand']
  %s0 = inlined_call_operand.hbm [shape: f32[256,256], index: 0, kind: input, shape index: {}]
  %s1 = inlined_call_operand.vmem [shape: f32[256,1], index: 1, kind: input, shape index: {}]
  %s2 = inlined_call_operand.vmem [shape: f32[256,128], index: 2, kind: input, shape index: {}]
  %s3 = inlined_call_operand.hbm [shape: f32[128,128], index: 3, kind: input, shape index: {}]
  %s4 = inlined_call_operand.vmem [shape: f32[1,128], index: 4, kind: input, shape index: {}]
  %s5 = inlined_call_operand.hbm [shape: f32[128,128], index: 5, kind: input, shape index: {}]
  %s6 = inlined_call_operand.vmem [shape: f32[1,128], index: 6, kind: input, shape index: {}]
  %s7 = inlined_call_operand.hbm [shape: f32[256,128], index: 7, kind: output, shape index: {0}]
  %s8 = inlined_call_operand.hbm [shape: f32[256,128], index: 8, kind: output, shape index: {1}]
  %s9 = inlined_call_operand.hbm [shape: f32[16,128], index: 9, kind: output, shape index: {2}]
  %s10 = inlined_call_operand.hbm [shape: f32[16,128], index: 10, kind: output, shape index: {3}]
  %11 = xla_tuple %s7, %s8, %s9, %s10
  %s12 = sld [smem:[#allocation0]]
  $region105: #{tpu_custom_call.1} parent=0
    _
  %s14 = ssub.s32 1, %s12
  %s15 = scalar_select 0, %s14, %s12
  $region1: #{tpu_custom_call.1} parent=0
    #allocation3 [shape = 'u8[262144]{0}', space=vmem, size = 0x40000, scoped, tag = 'input window, operand 0']
    #allocation4 [shape = 's32[2]{0}', space=sflag, size = 0x8, scoped, tag = 'scoped memory for tpu_custom_call.1']
    #allocation5 [shape = 's32[2]{0}', space=sflag, size = 0x8, scoped, tag = 'scoped memory for tpu_custom_call.1']
    #allocation6 [shape = 'u8[65536]{0}', space=vmem, size = 0x10000, scoped, tag = 'input window, operand 3, single buffered']
    #allocation7 [shape = 's32[1]{0}', space=sflag, size = 0x4, scoped, tag = 'scoped memory for tpu_custom_call.1']
    #allocation8 [shape = 'u8[65536]{0}', space=vmem, size = 0x10000, scoped, tag = 'input window, operand 5, single buffered']
    #allocation9 [shape = 'u8[131072]{0}', space=vmem, size = 0x20000, scoped, tag = 'output window, operand 0']
    #allocation10 [shape = 'u8[131072]{0}', space=vmem, size = 0x20000, scoped, tag = 'output window, operand 1']
    #allocation11 [shape = 's32[2]{0}', space=sflag, size = 0x8, scoped, tag = 'scoped memory for tpu_custom_call.1']
    #allocation12 [shape = 'u8[8192]{0}', space=vmem, size = 0x2000, scoped, tag = 'output window, operand 2']
    #allocation13 [shape = 'u8[8192]{0}', space=vmem, size = 0x2000, scoped, tag = 'output window, operand 3']
    #allocation14 [shape = 's32[2]{0}', space=sflag, size = 0x8, scoped, tag = 'scoped memory for tpu_custom_call.1']
    %16 = vsyncpa [#allocation4], 0
    %s17 = scalar_lea.sflag [#allocation4], 1
    %18 = vsyncpa %s17, 0
    %19 = vsyncpa [#allocation7], 0
    %20 = vsyncpa [#allocation5], 0
    %s21 = scalar_lea.sflag [#allocation5], 1
    %22 = vsyncpa %s21, 0
    %23 = vsyncpa [#allocation11], 0
    %s24 = scalar_lea.sflag [#allocation11], 1
    %25 = vsyncpa %s24, 0
    %26 = vsyncpa [#allocation14], 0
    %s27 = scalar_lea.sflag [#allocation14], 1
    %28 = vsyncpa %s27, 0
    loop: start=0, step=1, limit=4
    $region2: #{tpu_custom_call.1} parent=1 // loop_pre_header
      _
    $region3: #{tpu_custom_call.1} parent=1 // loop_header
      %s30 = sphi 0, %s34
      %p31 = scmp.ge.s32.totalorder %s30, 4
      %s37 = sphi 0, %s49
      %s38 = sphi 0, %s45
      %s39 = sphi 0, %s37
      %s40 = sphi 0, %s38
      %s41 = sphi 0, %s39
      %s42 = sphi 0, %s40
      %s54 = sphi 0, %s56
      %s57 = sphi 0, %s54
      %s58 = sphi 0, %s57
      %s74 = sphi 0, %s58
      %s80 = sphi 0, %s82
      %s83 = sphi 0, %s80
      %s84 = sphi 0, %s83
      %s100 = sphi 0, %s84
      %s104 = sphi 0, %s104
      %s106 = sphi 0, %s104
      %s107 = sphi 0, %s106
      %s121 = sphi 0, %s107
      %s125 = sphi 0, %s125
      %s127 = sphi 0, %s125
      %s128 = sphi 0, %s127
      %s142 = sphi 0, %s128
      %s146 = sphi 0, %s146
      %s148 = sphi 0, %s146
      %s149 = sphi 0, %s148
      %s163 = sphi 0, %s149
      %s167 = sphi 0, %s167
      %s169 = sphi 0, %s167
      %s170 = sphi 0, %s169
      %s184 = sphi 0, %s170
      %s188 = sphi 0, %s188
      %s190 = sphi 0, %s188
      %s191 = sphi 0, %s190
      %s205 = sphi 0, %s191
      %s211 = sphi 0, %s213
      %s214 = sphi 0, %s211
      %s215 = sphi 0, %s214
      %s231 = sphi 0, %s215
      %s237 = sphi 0, %s239
      %s240 = sphi 0, %s237
      %s241 = sphi 0, %s240
      %s257 = sphi 0, %s241
      %s263 = sphi 0, %s265
      %s266 = sphi 0, %s263
      %s267 = sphi 0, %s266
      %s283 = sphi 0, %s267
      %s289 = sphi 0, %s291
      %s292 = sphi 0, %s289
      %s293 = sphi 0, %s292
      %s309 = sphi 0, %s293
    $region4: #{tpu_custom_call.1} parent=1 // loop_header_branch
      %33 = sbr.rel (%p31) target = $region8
    $region5: #{tpu_custom_call.1} parent=1 // loop_body
      %s35 = ssub.s32 %s30, 1
      %s36 = ssub.s32 %s30, 2
      %s43 = sadd.s32 1, %s38
      %p44 = scmp.ge.s32.totalorder %s43, 1
      %s45 = scalar_select %p44, 0, %s43
      %s46 = sadd.s32 1, %s37
      %s47 = scalar_select %p44, %s46, %s37
      %p48 = scmp.ge.s32.totalorder %s47, 2
      %s49 = scalar_select %p48, 0, %s47
      %s50 = ssub.s32 %s37, %s49
      %s51 = ssub.s32 %s38, %s45
      %s52 = sor.u32 %s50, %s51
      %p53 = scmp.eq.s32.totalorder %s52, 0
      %s55 = sadd.s32 %s54, 1
      %s56 = scalar_select %p53, %s54, %s55
      %p59 = pneg %p53
      %p60 = scmp.eq.s32.totalorder %s30, 1
      %p61 = por %p59, %p60
      %p62 = scmp.ne.s32.totalorder %s54, %s57
      %p63 = scmp.eq.s32.totalorder %s30, 0
      %p64 = por %p62, %p63
      %p65 = scmp.ne.s32.totalorder %s54, %s57
      %p66 = scmp.eq.s32.totalorder %s35, 1
      %p67 = por %p65, %p66
      %p68 = scmp.ne.s32.totalorder %s57, %s58
      %p69 = scmp.eq.s32.totalorder %s35, 0
      %p70 = por %p68, %p69
      %p71 = scmp.ne.s32.totalorder %s57, %s58
      %p72 = scmp.eq.s32.totalorder %s36, 1
      %p73 = por %p71, %p72
      %p75 = scmp.ne.s32.totalorder %s58, %s74
      %p76 = scmp.eq.s32.totalorder %s36, 0
      %p77 = por %p75, %p76
      %s78 = ssub.s32 %s37, %s49
      %p79 = scmp.eq.s32.totalorder %s78, 0
      %s81 = sadd.s32 %s80, 1
      %s82 = scalar_select %p79, %s80, %s81
      %p85 = pneg %p79
      %p86 = scmp.eq.s32.totalorder %s30, 1
      %p87 = por %p85, %p86
      %p88 = scmp.ne.s32.totalorder %s80, %s83
      %p89 = scmp.eq.s32.totalorder %s30, 0
      %p90 = por %p88, %p89
      %p91 = scmp.ne.s32.totalorder %s80, %s83
      %p92 = scmp.eq.s32.totalorder %s35, 1
      %p93 = por %p91, %p92
      %p94 = scmp.ne.s32.totalorder %s83, %s84
      %p95 = scmp.eq.s32.totalorder %s35, 0
      %p96 = por %p94, %p95
      %p97 = scmp.ne.s32.totalorder %s83, %s84
      %p98 = scmp.eq.s32.totalorder %s36, 1
      %p99 = por %p97, %p98
      %p101 = scmp.ne.s32.totalorder %s84, %s100
      %p102 = scmp.eq.s32.totalorder %s36, 0
      %p103 = por %p101, %p102
      %s105 = sadd.s32 %s104, 1
      %p108 = scmp.eq.s32.totalorder %s30, 1
      %p109 = scmp.ne.s32.totalorder %s104, %s106
      %p110 = scmp.eq.s32.totalorder %s30, 0
      %p111 = por %p109, %p110
      %p112 = scmp.ne.s32.totalorder %s104, %s106
      %p113 = scmp.eq.s32.totalorder %s35, 1
      %p114 = por %p112, %p113
      %p115 = scmp.ne.s32.totalorder %s106, %s107
      %p116 = scmp.eq.s32.totalorder %s35, 0
      %p117 = por %p115, %p116
      %p118 = scmp.ne.s32.totalorder %s106, %s107
      %p119 = scmp.eq.s32.totalorder %s36, 1
      %p120 = por %p118, %p119
      %p122 = scmp.ne.s32.totalorder %s107, %s121
      %p123 = scmp.eq.s32.totalorder %s36, 0
      %p124 = por %p122, %p123
      %s126 = sadd.s32 %s125, 1
      %p129 = scmp.eq.s32.totalorder %s30, 1
      %p130 = scmp.ne.s32.totalorder %s125, %s127
      %p131 = scmp.eq.s32.totalorder %s30, 0
      %p132 = por %p130, %p131
      %p133 = scmp.ne.s32.totalorder %s125, %s127
      %p134 = scmp.eq.s32.totalorder %s35, 1
      %p135 = por %p133, %p134
      %p136 = scmp.ne.s32.totalorder %s127, %s128
      %p137 = scmp.eq.s32.totalorder %s35, 0
      %p138 = por %p136, %p137
      %p139 = scmp.ne.s32.totalorder %s127, %s128
      %p140 = scmp.eq.s32.totalorder %s36, 1
      %p141 = por %p139, %p140
      %p143 = scmp.ne.s32.totalorder %s128, %s142
      %p144 = scmp.eq.s32.totalorder %s36, 0
      %p145 = por %p143, %p144
      %s147 = sadd.s32 %s146, 1
      %p150 = scmp.eq.s32.totalorder %s30, 1
      %p151 = scmp.ne.s32.totalorder %s146, %s148
      %p152 = scmp.eq.s32.totalorder %s30, 0
      %p153 = por %p151, %p152
      %p154 = scmp.ne.s32.totalorder %s146, %s148
      %p155 = scmp.eq.s32.totalorder %s35, 1
      %p156 = por %p154, %p155
      %p157 = scmp.ne.s32.totalorder %s148, %s149
      %p158 = scmp.eq.s32.totalorder %s35, 0
      %p159 = por %p157, %p158
      %p160 = scmp.ne.s32.totalorder %s148, %s149
      %p161 = scmp.eq.s32.totalorder %s36, 1
      %p162 = por %p160, %p161
      %p164 = scmp.ne.s32.totalorder %s149, %s163
      %p165 = scmp.eq.s32.totalorder %s36, 0
      %p166 = por %p164, %p165
      %s168 = sadd.s32 %s167, 1
      %p171 = scmp.eq.s32.totalorder %s30, 1
      %p172 = scmp.ne.s32.totalorder %s167, %s169
      %p173 = scmp.eq.s32.totalorder %s30, 0
      %p174 = por %p172, %p173
      %p175 = scmp.ne.s32.totalorder %s167, %s169
      %p176 = scmp.eq.s32.totalorder %s35, 1
      %p177 = por %p175, %p176
      %p178 = scmp.ne.s32.totalorder %s169, %s170
      %p179 = scmp.eq.s32.totalorder %s35, 0
      %p180 = por %p178, %p179
      %p181 = scmp.ne.s32.totalorder %s169, %s170
      %p182 = scmp.eq.s32.totalorder %s36, 1
      %p183 = por %p181, %p182
      %p185 = scmp.ne.s32.totalorder %s170, %s184
      %p186 = scmp.eq.s32.totalorder %s36, 0
      %p187 = por %p185, %p186
      %s189 = sadd.s32 %s188, 1
      %p192 = scmp.eq.s32.totalorder %s30, 1
      %p193 = scmp.ne.s32.totalorder %s188, %s190
      %p194 = scmp.eq.s32.totalorder %s30, 0
      %p195 = por %p193, %p194
      %p196 = scmp.ne.s32.totalorder %s188, %s190
      %p197 = scmp.eq.s32.totalorder %s35, 1
      %p198 = por %p196, %p197
      %p199 = scmp.ne.s32.totalorder %s190, %s191
      %p200 = scmp.eq.s32.totalorder %s35, 0
      %p201 = por %p199, %p200
      %p202 = scmp.ne.s32.totalorder %s190, %s191
      %p203 = scmp.eq.s32.totalorder %s36, 1
      %p204 = por %p202, %p203
      %p206 = scmp.ne.s32.totalorder %s191, %s205
      %p207 = scmp.eq.s32.totalorder %s36, 0
      %p208 = por %p206, %p207
      %s209 = ssub.s32 %s37, %s49
      %p210 = scmp.eq.s32.totalorder %s209, 0
      %s212 = sadd.s32 %s211, 1
      %s213 = scalar_select %p210, %s211, %s212
      %p216 = pneg %p210
      %p217 = scmp.eq.s32.totalorder %s30, 1
      %p218 = por %p216, %p217
      %p219 = scmp.ne.s32.totalorder %s211, %s214
      %p220 = scmp.eq.s32.totalorder %s30, 0
      %p221 = por %p219, %p220
      %p222 = scmp.ne.s32.totalorder %s211, %s214
      %p223 = scmp.eq.s32.totalorder %s35, 1
      %p224 = por %p222, %p223
      %p225 = scmp.ne.s32.totalorder %s214, %s215
      %p226 = scmp.eq.s32.totalorder %s35, 0
      %p227 = por %p225, %p226
      %p228 = scmp.ne.s32.totalorder %s214, %s215
      %p229 = scmp.eq.s32.totalorder %s36, 1
      %p230 = por %p228, %p229
      %p232 = scmp.ne.s32.totalorder %s215, %s231
      %p233 = scmp.eq.s32.totalorder %s36, 0
      %p234 = por %p232, %p233
      %s235 = ssub.s32 %s37, %s49
      %p236 = scmp.eq.s32.totalorder %s235, 0
      %s238 = sadd.s32 %s237, 1
      %s239 = scalar_select %p236, %s237, %s238
      %p242 = pneg %p236
      %p243 = scmp.eq.s32.totalorder %s30, 1
      %p244 = por %p242, %p243
      %p245 = scmp.ne.s32.totalorder %s237, %s240
      %p246 = scmp.eq.s32.totalorder %s30, 0
      %p247 = por %p245, %p246
      %p248 = scmp.ne.s32.totalorder %s237, %s240
      %p249 = scmp.eq.s32.totalorder %s35, 1
      %p250 = por %p248, %p249
      %p251 = scmp.ne.s32.totalorder %s240, %s241
      %p252 = scmp.eq.s32.totalorder %s35, 0
      %p253 = por %p251, %p252
      %p254 = scmp.ne.s32.totalorder %s240, %s241
      %p255 = scmp.eq.s32.totalorder %s36, 1
      %p256 = por %p254, %p255
      %p258 = scmp.ne.s32.totalorder %s241, %s257
      %p259 = scmp.eq.s32.totalorder %s36, 0
      %p260 = por %p258, %p259
      %s261 = ssub.s32 %s37, %s49
      %p262 = scmp.eq.s32.totalorder %s261, 0
      %s264 = sadd.s32 %s263, 1
      %s265 = scalar_select %p262, %s263, %s264
      %p268 = pneg %p262
      %p269 = scmp.eq.s32.totalorder %s30, 1
      %p270 = por %p268, %p269
      %p271 = scmp.ne.s32.totalorder %s263, %s266
      %p272 = scmp.eq.s32.totalorder %s30, 0
      %p273 = por %p271, %p272
      %p274 = scmp.ne.s32.totalorder %s263, %s266
      %p275 = scmp.eq.s32.totalorder %s35, 1
      %p276 = por %p274, %p275
      %p277 = scmp.ne.s32.totalorder %s266, %s267
      %p278 = scmp.eq.s32.totalorder %s35, 0
      %p279 = por %p277, %p278
      %p280 = scmp.ne.s32.totalorder %s266, %s267
      %p281 = scmp.eq.s32.totalorder %s36, 1
      %p282 = por %p280, %p281
      %p284 = scmp.ne.s32.totalorder %s267, %s283
      %p285 = scmp.eq.s32.totalorder %s36, 0
      %p286 = por %p284, %p285
      %s287 = ssub.s32 %s37, %s49
      %p288 = scmp.eq.s32.totalorder %s287, 0
      %s290 = sadd.s32 %s289, 1
      %s291 = scalar_select %p288, %s289, %s290
      %p294 = pneg %p288
      %p295 = scmp.eq.s32.totalorder %s30, 1
      %p296 = por %p294, %p295
      %p297 = scmp.ne.s32.totalorder %s289, %s292
      %p298 = scmp.eq.s32.totalorder %s30, 0
      %p299 = por %p297, %p298
      %p300 = scmp.ne.s32.totalorder %s289, %s292
      %p301 = scmp.eq.s32.totalorder %s35, 1
      %p302 = por %p300, %p301
      %p303 = scmp.ne.s32.totalorder %s292, %s293
      %p304 = scmp.eq.s32.totalorder %s35, 0
      %p305 = por %p303, %p304
      %p306 = scmp.ne.s32.totalorder %s292, %s293
      %p307 = scmp.eq.s32.totalorder %s36, 1
      %p308 = por %p306, %p307
      %p310 = scmp.ne.s32.totalorder %s293, %s309
      %p311 = scmp.eq.s32.totalorder %s36, 0
      %p312 = por %p310, %p311
      %p313 = scmp.le.s32.totalorder 1, %s30
      %p314 = scmp.lt.s32.totalorder %s30, 3
      %p315 = pnand %p313, %p314
      %p316 = pneg %p315
      // Predicated region
      $region9: #{tpu_custom_call.1} parent=5 // pred_check
        _
      $region10: #{tpu_custom_call.1} parent=5 // pred_check_branch
        %318 = sbr.rel (%p315) target = $region12
      $region11: #{tpu_custom_call.1} parent=5 // pred_region
        %s319 = ssub.s32 %s30, 1
        // Predicated region
        $region13: #{tpu_custom_call.1} parent=11 // pred_check
          %p320 = pneg %p117
        $region14: #{tpu_custom_call.1} parent=11 // pred_check_branch
          %322 = sbr.rel (%p320) target = $region16
        $region15: #{tpu_custom_call.1} parent=11 // pred_region
          _
        $region16: #{tpu_custom_call.1} parent=11 // pred_fallthru
          _
        // Predicated region
        $region17: #{tpu_custom_call.1} parent=11 // pred_check
          %p323 = pneg %p138
        $region18: #{tpu_custom_call.1} parent=11 // pred_check_branch
          %325 = sbr.rel (%p323) target = $region20
        $region19: #{tpu_custom_call.1} parent=11 // pred_region
          %s327 = ssub.s32 2048, 2048
          %328 = vsyncadd [#allocation7], %s327
          %s329 = sshll.u32 [#allocation6], 4
          %s330 = int_to_ptr.vmem [resolvable:$true] %s329
          %335 = dma.hbm_to_vmem [thread:$0]  %s3, 2048, %s330, [#allocation7], 128, 128, 8
        $region20: #{tpu_custom_call.1} parent=11 // pred_fallthru
          _
        // Predicated region
        $region21: #{tpu_custom_call.1} parent=11 // pred_check
          %p336 = pneg %p159
        $region22: #{tpu_custom_call.1} parent=11 // pred_check_branch
          %338 = sbr.rel (%p336) target = $region24
        $region23: #{tpu_custom_call.1} parent=11 // pred_region
          _
        $region24: #{tpu_custom_call.1} parent=11 // pred_fallthru
          _
        // Predicated region
        $region25: #{tpu_custom_call.1} parent=11 // pred_check
          %p339 = pneg %p180
        $region26: #{tpu_custom_call.1} parent=11 // pred_check_branch
          %341 = sbr.rel (%p339) target = $region28
        $region27: #{tpu_custom_call.1} parent=11 // pred_region
          %s343 = ssub.s32 2048, 2048
          %344 = vsyncadd [#allocation7], %s343
          %s345 = sshll.u32 [#allocation8], 4
          %s346 = int_to_ptr.vmem [resolvable:$true] %s345
          %351 = dma.hbm_to_vmem [thread:$0]  %s5, 2048, %s346, [#allocation7], 128, 128, 8
        $region28: #{tpu_custom_call.1} parent=11 // pred_fallthru
          _
        // Predicated region
        $region29: #{tpu_custom_call.1} parent=11 // pred_check
          %p352 = pneg %p201
        $region30: #{tpu_custom_call.1} parent=11 // pred_check_branch
          %354 = sbr.rel (%p352) target = $region32
        $region31: #{tpu_custom_call.1} parent=11 // pred_region
          _
        $region32: #{tpu_custom_call.1} parent=11 // pred_fallthru
          _
      $region12: #{tpu_custom_call.1} parent=5 // pred_fallthru
        _
      %p355 = scmp.lt.s32.totalorder %s30, 2
      // Predicated region
      $region33: #{tpu_custom_call.1} parent=5 // pred_check
        %p356 = pneg %p355
      $region34: #{tpu_custom_call.1} parent=5 // pred_check_branch
        %358 = sbr.rel (%p356) target = $region36
      $region35: #{tpu_custom_call.1} parent=5 // pred_region
        // Predicated region
        $region37: #{tpu_custom_call.1} parent=35 // pred_check
          %p359 = pneg %p64
        $region38: #{tpu_custom_call.1} parent=35 // pred_check_branch
          %361 = sbr.rel (%p359) target = $region40
        $region39: #{tpu_custom_call.1} parent=35 // pred_region
          %s362 = sand.u32 %s54, 1
          %s363 = scalar_lea.sflag [#allocation4], %s362
          %s364 = sand.u32 %s54, 1
          %s365 = smul.addr %s364, 256
          %s366 = scalar_lea.vmem [#allocation3], %s365
          %s367 = smul.u32 16, %s37
          %s368 = smul.u32 2, %s38
          %s370 = ssub.s32 4096, 4096
          %371 = vsyncadd %s363, %s370
          %s372 = smul.addr %s367, 2
          %s373 = sadd.s32 %s368, %s372
          %s374 = smul.addr %s373, 128
          %s375 = scalar_lea.hbm %s0, %s374
          %s376 = sshll.u32 %s366, 4
          %s377 = int_to_ptr.vmem [resolvable:$true] %s376
          %382 = dma.hbm_to_vmem [thread:$0]  %s375, 4096, %s377, %s363, 256, 256, 16
        $region40: #{tpu_custom_call.1} parent=35 // pred_fallthru
          _
        // Predicated region
        $region41: #{tpu_custom_call.1} parent=35 // pred_check
          %p383 = pneg %p90
        $region42: #{tpu_custom_call.1} parent=35 // pred_check_branch
          %385 = sbr.rel (%p383) target = $region44
        $region43: #{tpu_custom_call.1} parent=35 // pred_region
          %s386 = smul.u32 16, %s37
          %p387 = scmp.lt.s32.totalorder %s386, 31
          %s388 = scalar_select %p387, %s386, 31
          %s389 = smul.addr %s388, 8
          %s390 = scalar_lea.vmem %s1, %s389
          %s391 = smul.u32 16, %s37
        $region44: #{tpu_custom_call.1} parent=35 // pred_fallthru
          _
      $region36: #{tpu_custom_call.1} parent=5 // pred_fallthru
        _
      %p392 = scmp.le.s32.totalorder 1, %s30
      %p393 = scmp.lt.s32.totalorder %s30, 3
      %p394 = pnand %p392, %p393
      %p395 = pneg %p394
      // Predicated region
      $region45: #{tpu_custom_call.1} parent=5 // pred_check
        _
      $region46: #{tpu_custom_call.1} parent=5 // pred_check_branch
        %397 = sbr.rel (%p394) target = $region48
      $region47: #{tpu_custom_call.1} parent=5 // pred_region
        %s398 = ssub.s32 %s30, 1
        %s399 = sand.u32 %s57, 1
        %s400 = scalar_lea.sflag [#allocation4], %s399
        %s401 = sand.u32 %s57, 1
        %s402 = smul.addr %s401, 256
        %s403 = scalar_lea.vmem [#allocation3], %s402
        // Predicated region
        $region49: #{tpu_custom_call.1} parent=47 // pred_check
          %p404 = pneg %p70
        $region50: #{tpu_custom_call.1} parent=47 // pred_check_branch
          %406 = sbr.rel (%p404) target = $region52
        $region51: #{tpu_custom_call.1} parent=47 // pred_region
          %407 = dma.done %s400, 4096
        $region52: #{tpu_custom_call.1} parent=47 // pred_fallthru
          _
        // Predicated region
        $region53: #{tpu_custom_call.1} parent=47 // pred_check
          %p408 = pneg %p138
        $region54: #{tpu_custom_call.1} parent=47 // pred_check_branch
          %410 = sbr.rel (%p408) target = $region56
        $region55: #{tpu_custom_call.1} parent=47 // pred_region
          %411 = dma.done [#allocation7], 2048
        $region56: #{tpu_custom_call.1} parent=47 // pred_fallthru
          _
        // Predicated region
        $region57: #{tpu_custom_call.1} parent=47 // pred_check
          %p412 = pneg %p180
        $region58: #{tpu_custom_call.1} parent=47 // pred_check_branch
          %414 = sbr.rel (%p412) target = $region60
        $region59: #{tpu_custom_call.1} parent=47 // pred_region
          %415 = dma.done [#allocation7], 2048
        $region60: #{tpu_custom_call.1} parent=47 // pred_fallthru
          _
        %s416 = sand.u32 %s57, 1
        %s417 = scalar_lea.sflag [#allocation4], %s416
        %s418 = sand.u32 %s57, 1
        %s419 = smul.addr %s418, 256
        %s420 = scalar_lea.vmem [#allocation3], %s419
        %p421 = pneg %p70
        %p422 = pneg %p67
        %s423 = smul.u32 16, %s39
        %p424 = scmp.lt.s32.totalorder %s423, 31
        %s425 = scalar_select %p424, %s423, 31
        %s426 = smul.addr %s425, 8
        %s427 = scalar_lea.vmem %s1, %s426
        %p428 = pneg %p96
        %p429 = pneg %p93
        %p430 = pneg %p117
        %p431 = pneg %p114
        %p432 = pneg %p138
        %p433 = pneg %p135
        %p434 = pneg %p159
        %p435 = pneg %p156
        %p436 = pneg %p180
        %p437 = pneg %p177
        %p438 = pneg %p201
        %p439 = pneg %p198
        %p440 = pneg %p227
        %p441 = pneg %p224
        %s442 = sand.u32 %s214, 1
        %s443 = scalar_lea.sflag [#allocation5], %s442
        %s444 = sand.u32 %s214, 1
        %s445 = smul.addr %s444, 128
        %s446 = scalar_lea.vmem [#allocation9], %s445
        %p447 = pneg %p253
        %p448 = pneg %p250
        %s449 = sand.u32 %s35, 1
        %s450 = scalar_lea.sflag [#allocation11], %s449
        %s451 = sand.u32 %s240, 1
        %s452 = smul.addr %s451, 128
        %s453 = scalar_lea.vmem [#allocation10], %s452
        %p454 = pneg %p279
        %p455 = pneg %p276
        %s456 = sand.u32 %s35, 1
        %s457 = scalar_lea.sflag [#allocation11], %s456
        %s458 = sand.u32 %s266, 1
        %s459 = smul.addr %s458, 8
        %s460 = scalar_lea.vmem [#allocation12], %s459
        %p461 = pneg %p305
        %p462 = pneg %p302
        %s463 = sand.u32 %s292, 1
        %s464 = scalar_lea.sflag [#allocation14], %s463
        %s465 = sand.u32 %s292, 1
        %s466 = smul.addr %s465, 8
        %s467 = scalar_lea.vmem [#allocation13], %s466
        %s468 = smul.u32 16, %s39
        %s469 = smul.u32 2, %s40
        %s470 = smul.u32 16, %s39
        %p471 = scmp.lt.s32.totalorder %s470, 31
        %s472 = scalar_select %p471, %s470, 31
        %s473 = smul.addr %s472, 8
        %s474 = scalar_lea.vmem %s1, %s473
        %s475 = smul.u32 16, %s39
        %s476 = smul.u32 16, %s39
        %s477 = smul.u32 16, %s39
        %s478 = smul.u32 %s39, 128
        %p479 = scmp.eq.s32.totalorder %s40, 0
        // Predicated region
        $region61: #{tpu_custom_call.1} parent=47 // pred_check
          %p480 = pneg %p479
        $region62: #{tpu_custom_call.1} parent=47 // pred_check_branch
          %482 = sbr.rel (%p480) target = $region64
        $region63: #{tpu_custom_call.1} parent=47 // pred_region
          %483 = vst [vmem:[#allocation2] sm:$0xff] 0.0
          %484 = vst [vmem:[#allocation2 + $0x8] sm:$0xff] 0.0
          %485 = vst [vmem:[#allocation2 + $0x10] sm:$0xff] 0.0
          %486 = vst [vmem:[#allocation2 + $0x18] sm:$0xff] 0.0
          %487 = vst [vmem:[#allocation2 + $0x20] sm:$0xff] 0.0
          %488 = vst [vmem:[#allocation2 + $0x28] sm:$0xff] 0.0
          %489 = vst [vmem:[#allocation2 + $0x30] sm:$0xff] 0.0
          %490 = vst [vmem:[#allocation2 + $0x38] sm:$0xff] 0.0
          %491 = vst [vmem:[#allocation2 + $0x40] sm:$0xff] 0.0
          %492 = vst [vmem:[#allocation2 + $0x48] sm:$0xff] 0.0
          %493 = vst [vmem:[#allocation2 + $0x50] sm:$0xff] 0.0
          %494 = vst [vmem:[#allocation2 + $0x58] sm:$0xff] 0.0
          %495 = vst [vmem:[#allocation2 + $0x60] sm:$0xff] 0.0
          %496 = vst [vmem:[#allocation2 + $0x68] sm:$0xff] 0.0
          %497 = vst [vmem:[#allocation2 + $0x70] sm:$0xff] 0.0
          %498 = vst [vmem:[#allocation2 + $0x78] sm:$0xff] 0.0
        $region64: #{tpu_custom_call.1} parent=47 // pred_fallthru
          _
        %s499 = smul.u32 %s40, 256
        %s500 = scalar_lea.vmem %s2, %s499
        %v501 = vld [vmem:[%s500] sm:$0xff]
        %v502 = vld [vmem:[%s500 + $0x8] sm:$0xff]
        %v503 = vld [vmem:[%s500 + $0x10] sm:$0xff]
        %v504 = vld [vmem:[%s500 + $0x18] sm:$0xff]
        %v505 = vld [vmem:[%s500 + $0x20] sm:$0xff]
        %v506 = vld [vmem:[%s500 + $0x28] sm:$0xff]
        %v507 = vld [vmem:[%s500 + $0x30] sm:$0xff]
        %v508 = vld [vmem:[%s500 + $0x38] sm:$0xff]
        %v509 = vld [vmem:[%s500 + $0x40] sm:$0xff]
        %v510 = vld [vmem:[%s500 + $0x48] sm:$0xff]
        %v511 = vld [vmem:[%s500 + $0x50] sm:$0xff]
        %v512 = vld [vmem:[%s500 + $0x58] sm:$0xff]
        %v513 = vld [vmem:[%s500 + $0x60] sm:$0xff]
        %v514 = vld [vmem:[%s500 + $0x68] sm:$0xff]
        %v515 = vld [vmem:[%s500 + $0x70] sm:$0xff]
        %v516 = vld [vmem:[%s500 + $0x78] sm:$0xff]
        %v517 = vld [vmem:[%s500 + $0x80] sm:$0xff]
        %v518 = vld [vmem:[%s500 + $0x88] sm:$0xff]
        %v519 = vld [vmem:[%s500 + $0x90] sm:$0xff]
        %v520 = vld [vmem:[%s500 + $0x98] sm:$0xff]
        %v521 = vld [vmem:[%s500 + $0xa0] sm:$0xff]
        %v522 = vld [vmem:[%s500 + $0xa8] sm:$0xff]
        %v523 = vld [vmem:[%s500 + $0xb0] sm:$0xff]
        %v524 = vld [vmem:[%s500 + $0xb8] sm:$0xff]
        %v525 = vld [vmem:[%s500 + $0xc0] sm:$0xff]
        %v526 = vld [vmem:[%s500 + $0xc8] sm:$0xff]
        %v527 = vld [vmem:[%s500 + $0xd0] sm:$0xff]
        %v528 = vld [vmem:[%s500 + $0xd8] sm:$0xff]
        %v529 = vld [vmem:[%s500 + $0xe0] sm:$0xff]
        %v530 = vld [vmem:[%s500 + $0xe8] sm:$0xff]
        %v531 = vld [vmem:[%s500 + $0xf0] sm:$0xff]
        %v532 = vld [vmem:[%s500 + $0xf8] sm:$0xff]
        %v533 = vld [vmem:[#allocation2] sm:$0xff]
        %v534 = vld [vmem:[#allocation2 + $0x8] sm:$0xff]
        %v535 = vld [vmem:[#allocation2 + $0x10] sm:$0xff]
        %v536 = vld [vmem:[#allocation2 + $0x18] sm:$0xff]
        %v537 = vld [vmem:[#allocation2 + $0x20] sm:$0xff]
        %v538 = vld [vmem:[#allocation2 + $0x28] sm:$0xff]
        %v539 = vld [vmem:[#allocation2 + $0x30] sm:$0xff]
        %v540 = vld [vmem:[#allocation2 + $0x38] sm:$0xff]
        %v541 = vld [vmem:[#allocation2 + $0x40] sm:$0xff]
        %v542 = vld [vmem:[#allocation2 + $0x48] sm:$0xff]
        %v543 = vld [vmem:[#allocation2 + $0x50] sm:$0xff]
        %v544 = vld [vmem:[#allocation2 + $0x58] sm:$0xff]
        %v545 = vld [vmem:[#allocation2 + $0x60] sm:$0xff]
        %v546 = vld [vmem:[#allocation2 + $0x68] sm:$0xff]
        %v547 = vld [vmem:[#allocation2 + $0x70] sm:$0xff]
        %v548 = vld [vmem:[#allocation2 + $0x78] sm:$0xff]
        %v549 = vld [vmem:[%s403] sm:$0xff]
        %v550 = vld [vmem:[%s403 + $0x8] sm:$0xff]
        %v551 = vld [vmem:[%s403 + $0x10] sm:$0xff]
        %v552 = vld [vmem:[%s403 + $0x18] sm:$0xff]
        %v553 = vld [vmem:[%s403 + $0x20] sm:$0xff]
        %v554 = vld [vmem:[%s403 + $0x28] sm:$0xff]
        %v555 = vld [vmem:[%s403 + $0x30] sm:$0xff]
        %v556 = vld [vmem:[%s403 + $0x38] sm:$0xff]
        %v557 = vld [vmem:[%s403 + $0x40] sm:$0xff]
        %v558 = vld [vmem:[%s403 + $0x48] sm:$0xff]
        %v559 = vld [vmem:[%s403 + $0x50] sm:$0xff]
        %v560 = vld [vmem:[%s403 + $0x58] sm:$0xff]
        %v561 = vld [vmem:[%s403 + $0x60] sm:$0xff]
        %v562 = vld [vmem:[%s403 + $0x68] sm:$0xff]
        %v563 = vld [vmem:[%s403 + $0x70] sm:$0xff]
        %v564 = vld [vmem:[%s403 + $0x78] sm:$0xff]
        %v565 = vld [vmem:[%s403 + $0x80] sm:$0xff]
        %v566 = vld [vmem:[%s403 + $0x88] sm:$0xff]
        %v567 = vld [vmem:[%s403 + $0x90] sm:$0xff]
        %v568 = vld [vmem:[%s403 + $0x98] sm:$0xff]
        %v569 = vld [vmem:[%s403 + $0xa0] sm:$0xff]
        %v570 = vld [vmem:[%s403 + $0xa8] sm:$0xff]
        %v571 = vld [vmem:[%s403 + $0xb0] sm:$0xff]
        %v572 = vld [vmem:[%s403 + $0xb8] sm:$0xff]
        %v573 = vld [vmem:[%s403 + $0xc0] sm:$0xff]
        %v574 = vld [vmem:[%s403 + $0xc8] sm:$0xff]
        %v575 = vld [vmem:[%s403 + $0xd0] sm:$0xff]
        %v576 = vld [vmem:[%s403 + $0xd8] sm:$0xff]
        %v577 = vld [vmem:[%s403 + $0xe0] sm:$0xff]
        %v578 = vld [vmem:[%s403 + $0xe8] sm:$0xff]
        %v579 = vld [vmem:[%s403 + $0xf0] sm:$0xff]
        %v580 = vld [vmem:[%s403 + $0xf8] sm:$0xff]
        %581 = vmatprep.subr.mxu0 0.0
        %582 = vmatpush1.msra.mxu0 %v516
        %583 = vmatprep.subr.mxu0 0.0
        %584 = vmatpush1.msra.mxu0 %v515
        %585 = vmatprep.subr.mxu0 0.0
        %586 = vmatpush1.msra.mxu0 %v514
        %587 = vmatprep.subr.mxu0 0.0
        %588 = vmatpush1.msra.mxu0 %v513
        %589 = vmatprep.subr.mxu0 0.0
        %590 = vmatpush1.msra.mxu0 %v512
        %591 = vmatprep.subr.mxu0 0.0
        %592 = vmatpush1.msra.mxu0 %v511
        %593 = vmatprep.subr.mxu0 0.0
        %594 = vmatpush1.msra.mxu0 %v510
        %595 = vmatprep.subr.mxu0 0.0
        %596 = vmatpush1.msra.mxu0 %v509
        %597 = vmatprep.subr.mxu0 0.0
        %598 = vmatpush1.msra.mxu0 %v508
        %599 = vmatprep.subr.mxu0 0.0
        %600 = vmatpush1.msra.mxu0 %v507
        %601 = vmatprep.subr.mxu0 0.0
        %602 = vmatpush1.msra.mxu0 %v506
        %603 = vmatprep.subr.mxu0 0.0
        %604 = vmatpush1.msra.mxu0 %v505
        %605 = vmatprep.subr.mxu0 0.0
        %606 = vmatpush1.msra.mxu0 %v504
        %607 = vmatprep.subr.mxu0 0.0
        %608 = vmatpush1.msra.mxu0 %v503
        %609 = vmatprep.subr.mxu0 0.0
        %610 = vmatpush1.msra.mxu0 %v502
        %611 = vmatprep.subr.mxu0 0.0
        %612 = vmatpush1.msra.mxu0 %v501
        %613 = vmatprep.subr.mxu0 0.0
        %614 = vmatpush2.msra.mxu0 %v532
        %615 = vmatprep.subr.mxu0 0.0
        %616 = vmatpush2.msra.mxu0 %v531
        %617 = vmatprep.subr.mxu0 0.0
        %618 = vmatpush2.msra.mxu0 %v530
        %619 = vmatprep.subr.mxu0 0.0
        %620 = vmatpush2.msra.mxu0 %v529
        %621 = vmatprep.subr.mxu0 0.0
        %622 = vmatpush2.msra.mxu0 %v528
        %623 = vmatprep.subr.mxu0 0.0
        %624 = vmatpush2.msra.mxu0 %v527
        %625 = vmatprep.subr.mxu0 0.0
        %626 = vmatpush2.msra.mxu0 %v526
        %627 = vmatprep.subr.mxu0 0.0
        %628 = vmatpush2.msra.mxu0 %v525
        %629 = vmatprep.subr.mxu0 0.0
        %630 = vmatpush2.msra.mxu0 %v524
        %631 = vmatprep.subr.mxu0 0.0
        %632 = vmatpush2.msra.mxu0 %v523
        %633 = vmatprep.subr.mxu0 0.0
        %634 = vmatpush2.msra.mxu0 %v522
        %635 = vmatprep.subr.mxu0 0.0
        %636 = vmatpush2.msra.mxu0 %v521
        %637 = vmatprep.subr.mxu0 0.0
        %638 = vmatpush2.msra.mxu0 %v520
        %639 = vmatprep.subr.mxu0 0.0
        %640 = vmatpush2.msra.mxu0 %v519
        %641 = vmatprep.subr.mxu0 0.0
        %642 = vmatpush2.msra.mxu0 %v518
        %643 = vmatprep.subr.mxu0 0.0
        %644 = vmatpush2.msra.mxu0 %v517
        %645 = vmatprep.mubr.f32.mxu0 %v550
        %646 = vmatmul.mubr.f32.gmra.mxu0 %v549
        %v647 = vpop.f32.mrf.mxu0
        %v648 = vadd.f32 0.0, %v647
        %v649 = vpop.f32.mrf.mxu0
        %650 = vmatprep.mubr.f32.mxu0 %v552
        %651 = vmatmul.mubr.f32.gmra.mxu0 %v551
        %v652 = vpop.f32.mrf.mxu0
        %v653 = vadd.f32 0.0, %v652
        %v654 = vpop.f32.mrf.mxu0
        %655 = vmatprep.mubr.f32.mxu0 %v554
        %656 = vmatmul.mubr.f32.gmra.mxu0 %v553
        %v657 = vpop.f32.mrf.mxu0
        %v658 = vadd.f32 0.0, %v657
        %v659 = vpop.f32.mrf.mxu0
        %660 = vmatprep.mubr.f32.mxu0 %v556
        %661 = vmatmul.mubr.f32.gmra.mxu0 %v555
        %v662 = vpop.f32.mrf.mxu0
        %v663 = vadd.f32 0.0, %v662
        %v664 = vpop.f32.mrf.mxu0
        %665 = vmatprep.mubr.f32.mxu0 %v558
        %666 = vmatmul.mubr.f32.gmra.mxu0 %v557
        %v667 = vpop.f32.mrf.mxu0
        %v668 = vadd.f32 0.0, %v667
        %v669 = vpop.f32.mrf.mxu0
        %670 = vmatprep.mubr.f32.mxu0 %v560
        %671 = vmatmul.mubr.f32.gmra.mxu0 %v559
        %v672 = vpop.f32.mrf.mxu0
        %v673 = vadd.f32 0.0, %v672
        %v674 = vpop.f32.mrf.mxu0
        %675 = vmatprep.mubr.f32.mxu0 %v562
        %676 = vmatmul.mubr.f32.gmra.mxu0 %v561
        %v677 = vpop.f32.mrf.mxu0
        %v678 = vadd.f32 0.0, %v677
        %v679 = vpop.f32.mrf.mxu0
        %680 = vmatprep.mubr.f32.mxu0 %v564
        %681 = vmatmul.mubr.f32.gmra.mxu0 %v563
        %v682 = vpop.f32.mrf.mxu0
        %v683 = vadd.f32 0.0, %v682
        %v684 = vpop.f32.mrf.mxu0
        %685 = vmatprep.mubr.f32.mxu0 %v566
        %686 = vmatmul.mubr.f32.gmra.mxu0 %v565
        %v687 = vpop.f32.mrf.mxu0
        %v688 = vadd.f32 0.0, %v687
        %v689 = vpop.f32.mrf.mxu0
        %690 = vmatprep.mubr.f32.mxu0 %v568
        %691 = vmatmul.mubr.f32.gmra.mxu0 %v567
        %v692 = vpop.f32.mrf.mxu0
        %v693 = vadd.f32 0.0, %v692
        %v694 = vpop.f32.mrf.mxu0
        %695 = vmatprep.mubr.f32.mxu0 %v570
        %696 = vmatmul.mubr.f32.gmra.mxu0 %v569
        %v697 = vpop.f32.mrf.mxu0
        %v698 = vadd.f32 0.0, %v697
        %v699 = vpop.f32.mrf.mxu0
        %700 = vmatprep.mubr.f32.mxu0 %v572
        %701 = vmatmul.mubr.f32.gmra.mxu0 %v571
        %v702 = vpop.f32.mrf.mxu0
        %v703 = vadd.f32 0.0, %v702
        %v704 = vpop.f32.mrf.mxu0
        %705 = vmatprep.mubr.f32.mxu0 %v574
        %706 = vmatmul.mubr.f32.gmra.mxu0 %v573
        %v707 = vpop.f32.mrf.mxu0
        %v708 = vadd.f32 0.0, %v707
        %v709 = vpop.f32.mrf.mxu0
        %710 = vmatprep.mubr.f32.mxu0 %v576
        %711 = vmatmul.mubr.f32.gmra.mxu0 %v575
        %v712 = vpop.f32.mrf.mxu0
        %v713 = vadd.f32 0.0, %v712
        %v714 = vpop.f32.mrf.mxu0
        %715 = vmatprep.mubr.f32.mxu0 %v578
        %716 = vmatmul.mubr.f32.gmra.mxu0 %v577
        %v717 = vpop.f32.mrf.mxu0
        %v718 = vadd.f32 0.0, %v717
        %v719 = vpop.f32.mrf.mxu0
        %720 = vmatprep.mubr.f32.mxu0 %v580
        %721 = vmatmul.mubr.f32.gmra.mxu0 %v579
        %v722 = vpop.f32.mrf.mxu0
        %v723 = vadd.f32 0.0, %v722
        %v724 = vpop.f32.mrf.mxu0
        %725 = vdwg.mxu0
        %v726 = vadd.f32 %v533, %v648
        %v727 = vadd.f32 %v534, %v653
        %v728 = vadd.f32 %v535, %v658
        %v729 = vadd.f32 %v536, %v663
        %v730 = vadd.f32 %v537, %v668
        %v731 = vadd.f32 %v538, %v673
        %v732 = vadd.f32 %v539, %v678
        %v733 = vadd.f32 %v540, %v683
        %v734 = vadd.f32 %v541, %v688
        %v735 = vadd.f32 %v542, %v693
        %v736 = vadd.f32 %v543, %v698
        %v737 = vadd.f32 %v544, %v703
        %v738 = vadd.f32 %v545, %v708
        %v739 = vadd.f32 %v546, %v713
        %v740 = vadd.f32 %v547, %v718
        %v741 = vadd.f32 %v548, %v723
        %742 = vst [vmem:[#allocation2] sm:$0xff] %v726
        %743 = vst [vmem:[#allocation2 + $0x8] sm:$0xff] %v727
        %744 = vst [vmem:[#allocation2 + $0x10] sm:$0xff] %v728
        %745 = vst [vmem:[#allocation2 + $0x18] sm:$0xff] %v729
        %746 = vst [vmem:[#allocation2 + $0x20] sm:$0xff] %v730
        %747 = vst [vmem:[#allocation2 + $0x28] sm:$0xff] %v731
        %748 = vst [vmem:[#allocation2 + $0x30] sm:$0xff] %v732
        %749 = vst [vmem:[#allocation2 + $0x38] sm:$0xff] %v733
        %750 = vst [vmem:[#allocation2 + $0x40] sm:$0xff] %v734
        %751 = vst [vmem:[#allocation2 + $0x48] sm:$0xff] %v735
        %752 = vst [vmem:[#allocation2 + $0x50] sm:$0xff] %v736
        %753 = vst [vmem:[#allocation2 + $0x58] sm:$0xff] %v737
        %754 = vst [vmem:[#allocation2 + $0x60] sm:$0xff] %v738
        %755 = vst [vmem:[#allocation2 + $0x68] sm:$0xff] %v739
        %756 = vst [vmem:[#allocation2 + $0x70] sm:$0xff] %v740
        %757 = vst [vmem:[#allocation2 + $0x78] sm:$0xff] %v741
        // Predicated region
        $region65: #{tpu_custom_call.1} parent=47 // pred_check
          %p758 = pneg %p479
        $region66: #{tpu_custom_call.1} parent=47 // pred_check_branch
          %760 = sbr.rel (%p758) target = $region68
        $region67: #{tpu_custom_call.1} parent=47 // pred_region
          %v761 = vld [vmem:[#allocation2] sm:$0xff]
          %v762 = vld [vmem:[#allocation2 + $0x8] sm:$0xff]
          %v763 = vld [vmem:[#allocation2 + $0x10] sm:$0xff]
          %v764 = vld [vmem:[#allocation2 + $0x18] sm:$0xff]
          %v765 = vld [vmem:[#allocation2 + $0x20] sm:$0xff]
          %v766 = vld [vmem:[#allocation2 + $0x28] sm:$0xff]
          %v767 = vld [vmem:[#allocation2 + $0x30] sm:$0xff]
          %v768 = vld [vmem:[#allocation2 + $0x38] sm:$0xff]
          %v769 = vld [vmem:[#allocation2 + $0x40] sm:$0xff]
          %v770 = vld [vmem:[#allocation2 + $0x48] sm:$0xff]
          %v771 = vld [vmem:[#allocation2 + $0x50] sm:$0xff]
          %v772 = vld [vmem:[#allocation2 + $0x58] sm:$0xff]
          %v773 = vld [vmem:[#allocation2 + $0x60] sm:$0xff]
          %v774 = vld [vmem:[#allocation2 + $0x68] sm:$0xff]
          %v775 = vld [vmem:[#allocation2 + $0x70] sm:$0xff]
          %v776 = vld [vmem:[#allocation2 + $0x78] sm:$0xff]
          %v777 = vld [vmem:[%s474] sm:$0xff]
          %v778 = vld [vmem:[%s474 + $0x8] sm:$0xff]
          %v779 = vld [vmem:[%s474 + $0x10] sm:$0xff]
          %v780 = vld [vmem:[%s474 + $0x18] sm:$0xff]
          %v781 = vld [vmem:[%s474 + $0x20] sm:$0xff]
          %v782 = vld [vmem:[%s474 + $0x28] sm:$0xff]
          %v783 = vld [vmem:[%s474 + $0x30] sm:$0xff]
          %v784 = vld [vmem:[%s474 + $0x38] sm:$0xff]
          %v785 = vld [vmem:[%s474 + $0x40] sm:$0xff]
          %v786 = vld [vmem:[%s474 + $0x48] sm:$0xff]
          %v787 = vld [vmem:[%s474 + $0x50] sm:$0xff]
          %v788 = vld [vmem:[%s474 + $0x58] sm:$0xff]
          %v789 = vld [vmem:[%s474 + $0x60] sm:$0xff]
          %v790 = vld [vmem:[%s474 + $0x68] sm:$0xff]
          %v791 = vld [vmem:[%s474 + $0x70] sm:$0xff]
          %v792 = vld [vmem:[%s474 + $0x78] sm:$0xff]
          %794 = vset.pattern.permute.xlu0 0
          %795 = vperm.xlu0 %794, %v777
          %v796 = vpop.permute.xlu0 %795
          %799 = vset.pattern.permute.xlu0 0
          %800 = vperm.xlu0 %799, %v778
          %v801 = vpop.permute.xlu0 %800
          %804 = vset.pattern.permute.xlu0 0
          %805 = vperm.xlu0 %804, %v779
          %v806 = vpop.permute.xlu0 %805
          %809 = vset.pattern.permute.xlu0 0
          %810 = vperm.xlu0 %809, %v780
          %v811 = vpop.permute.xlu0 %810
          %814 = vset.pattern.permute.xlu0 0
          %815 = vperm.xlu0 %814, %v781
          %v816 = vpop.permute.xlu0 %815
          %819 = vset.pattern.permute.xlu0 0
          %820 = vperm.xlu0 %819, %v782
          %v821 = vpop.permute.xlu0 %820
          %824 = vset.pattern.permute.xlu0 0
          %825 = vperm.xlu0 %824, %v783
          %v826 = vpop.permute.xlu0 %825
          %829 = vset.pattern.permute.xlu0 0
          %830 = vperm.xlu0 %829, %v784
          %v831 = vpop.permute.xlu0 %830
          %834 = vset.pattern.permute.xlu0 0
          %835 = vperm.xlu0 %834, %v785
          %v836 = vpop.permute.xlu0 %835
          %839 = vset.pattern.permute.xlu0 0
          %840 = vperm.xlu0 %839, %v786
          %v841 = vpop.permute.xlu0 %840
          %844 = vset.pattern.permute.xlu0 0
          %845 = vperm.xlu0 %844, %v787
          %v846 = vpop.permute.xlu0 %845
          %849 = vset.pattern.permute.xlu0 0
          %850 = vperm.xlu0 %849, %v788
          %v851 = vpop.permute.xlu0 %850
          %854 = vset.pattern.permute.xlu0 0
          %855 = vperm.xlu0 %854, %v789
          %v856 = vpop.permute.xlu0 %855
          %859 = vset.pattern.permute.xlu0 0
          %860 = vperm.xlu0 %859, %v790
          %v861 = vpop.permute.xlu0 %860
          %864 = vset.pattern.permute.xlu0 0
          %865 = vperm.xlu0 %864, %v791
          %v866 = vpop.permute.xlu0 %865
          %869 = vset.pattern.permute.xlu0 0
          %870 = vperm.xlu0 %869, %v792
          %v871 = vpop.permute.xlu0 %870
          %v873 = vmul.f32 %v761, %v796
          %v874 = vmul.f32 %v762, %v801
          %v875 = vmul.f32 %v763, %v806
          %v876 = vmul.f32 %v764, %v811
          %v877 = vmul.f32 %v765, %v816
          %v878 = vmul.f32 %v766, %v821
          %v879 = vmul.f32 %v767, %v826
          %v880 = vmul.f32 %v768, %v831
          %v881 = vmul.f32 %v769, %v836
          %v882 = vmul.f32 %v770, %v841
          %v883 = vmul.f32 %v771, %v846
          %v884 = vmul.f32 %v772, %v851
          %v885 = vmul.f32 %v773, %v856
          %v886 = vmul.f32 %v774, %v861
          %v887 = vmul.f32 %v775, %v866
          %v888 = vmul.f32 %v776, %v871
          %v889 = vld [vmem:[#allocation6] sm:$0xff]
          %v890 = vld [vmem:[#allocation6 + $0x8] sm:$0xff]
          %v891 = vld [vmem:[#allocation6 + $0x10] sm:$0xff]
          %v892 = vld [vmem:[#allocation6 + $0x18] sm:$0xff]
          %v893 = vld [vmem:[#allocation6 + $0x20] sm:$0xff]
          %v894 = vld [vmem:[#allocation6 + $0x28] sm:$0xff]
          %v895 = vld [vmem:[#allocation6 + $0x30] sm:$0xff]
          %v896 = vld [vmem:[#allocation6 + $0x38] sm:$0xff]
          %v897 = vld [vmem:[#allocation6 + $0x40] sm:$0xff]
          %v898 = vld [vmem:[#allocation6 + $0x48] sm:$0xff]
          %v899 = vld [vmem:[#allocation6 + $0x50] sm:$0xff]
          %v900 = vld [vmem:[#allocation6 + $0x58] sm:$0xff]
          %v901 = vld [vmem:[#allocation6 + $0x60] sm:$0xff]
          %v902 = vld [vmem:[#allocation6 + $0x68] sm:$0xff]
          %v903 = vld [vmem:[#allocation6 + $0x70] sm:$0xff]
          %v904 = vld [vmem:[#allocation6 + $0x78] sm:$0xff]
          %v905 = vld [vmem:[%s4] sm:$0x1]
          %v907 = vlaneseq
          %v908 = vshrl.u32 %v907, 7
          %v909 = vsub.s32 0, %v908
          %v910 = vrot.slane %v905, %v909
          %912 = vmatprep.subr.mxu0 0.0
          %913 = vmatpush1.msra.mxu0 %v904
          %914 = vmatprep.subr.mxu0 0.0
          %915 = vmatpush1.msra.mxu0 %v903
          %916 = vmatprep.subr.mxu0 0.0
          %917 = vmatpush1.msra.mxu0 %v902
          %918 = vmatprep.subr.mxu0 0.0
          %919 = vmatpush1.msra.mxu0 %v901
          %920 = vmatprep.subr.mxu0 0.0
          %921 = vmatpush1.msra.mxu0 %v900
          %922 = vmatprep.subr.mxu0 0.0
          %923 = vmatpush1.msra.mxu0 %v899
          %924 = vmatprep.subr.mxu0 0.0
          %925 = vmatpush1.msra.mxu0 %v898
          %926 = vmatprep.subr.mxu0 0.0
          %927 = vmatpush1.msra.mxu0 %v897
          %928 = vmatprep.subr.mxu0 0.0
          %929 = vmatpush1.msra.mxu0 %v896
          %930 = vmatprep.subr.mxu0 0.0
          %931 = vmatpush1.msra.mxu0 %v895
          %932 = vmatprep.subr.mxu0 0.0
          %933 = vmatpush1.msra.mxu0 %v894
          %934 = vmatprep.subr.mxu0 0.0
          %935 = vmatpush1.msra.mxu0 %v893
          %936 = vmatprep.subr.mxu0 0.0
          %937 = vmatpush1.msra.mxu0 %v892
          %938 = vmatprep.subr.mxu0 0.0
          %939 = vmatpush1.msra.mxu0 %v891
          %940 = vmatprep.subr.mxu0 0.0
          %941 = vmatpush1.msra.mxu0 %v890
          %942 = vmatprep.subr.mxu0 0.0
          %943 = vmatpush1.msra.mxu0 %v889
          %944 = vmatprep.subr.mxu0 0.0
          %945 = vmatpush2.msra.mxu0 0.0
          %946 = vmatprep.subr.mxu0 0.0
          %947 = vmatpush2.msra.mxu0 0.0
          %948 = vmatprep.subr.mxu0 0.0
          %949 = vmatpush2.msra.mxu0 0.0
          %950 = vmatprep.subr.mxu0 0.0
          %951 = vmatpush2.msra.mxu0 0.0
          %952 = vmatprep.subr.mxu0 0.0
          %953 = vmatpush2.msra.mxu0 0.0
          %954 = vmatprep.subr.mxu0 0.0
          %955 = vmatpush2.msra.mxu0 0.0
          %956 = vmatprep.subr.mxu0 0.0
          %957 = vmatpush2.msra.mxu0 0.0
          %958 = vmatprep.subr.mxu0 0.0
          %959 = vmatpush2.msra.mxu0 0.0
          %960 = vmatprep.subr.mxu0 0.0
          %961 = vmatpush2.msra.mxu0 0.0
          %962 = vmatprep.subr.mxu0 0.0
          %963 = vmatpush2.msra.mxu0 0.0
          %964 = vmatprep.subr.mxu0 0.0
          %965 = vmatpush2.msra.mxu0 0.0
          %966 = vmatprep.subr.mxu0 0.0
          %967 = vmatpush2.msra.mxu0 0.0
          %968 = vmatprep.subr.mxu0 0.0
          %969 = vmatpush2.msra.mxu0 0.0
          %970 = vmatprep.subr.mxu0 0.0
          %971 = vmatpush2.msra.mxu0 0.0
          %972 = vmatprep.subr.mxu0 0.0
          %973 = vmatpush2.msra.mxu0 0.0
          %974 = vmatprep.subr.mxu0 0.0
          %975 = vmatpush2.msra.mxu0 0.0
          %976 = vmatprep.mubr.f32.mxu0 0.0
          %977 = vmatmul.mubr.f32.gmra.mxu0 %v873
          %v978 = vpop.f32.mrf.mxu0
          %v979 = vadd.f32 %v910, %v978
          %v980 = vpop.f32.mrf.mxu0
          %981 = vmatprep.mubr.f32.mxu0 0.0
          %982 = vmatmul.mubr.f32.gmra.mxu0 %v874
          %v983 = vpop.f32.mrf.mxu0
          %v984 = vadd.f32 %v910, %v983
          %v985 = vpop.f32.mrf.mxu0
          %986 = vmatprep.mubr.f32.mxu0 0.0
          %987 = vmatmul.mubr.f32.gmra.mxu0 %v875
          %v988 = vpop.f32.mrf.mxu0
          %v989 = vadd.f32 %v910, %v988
          %v990 = vpop.f32.mrf.mxu0
          %991 = vmatprep.mubr.f32.mxu0 0.0
          %992 = vmatmul.mubr.f32.gmra.mxu0 %v876
          %v993 = vpop.f32.mrf.mxu0
          %v994 = vadd.f32 %v910, %v993
          %v995 = vpop.f32.mrf.mxu0
          %996 = vmatprep.mubr.f32.mxu0 0.0
          %997 = vmatmul.mubr.f32.gmra.mxu0 %v877
          %v998 = vpop.f32.mrf.mxu0
          %v999 = vadd.f32 %v910, %v998
          %v1000 = vpop.f32.mrf.mxu0
          %1001 = vmatprep.mubr.f32.mxu0 0.0
          %1002 = vmatmul.mubr.f32.gmra.mxu0 %v878
          %v1003 = vpop.f32.mrf.mxu0
          %v1004 = vadd.f32 %v910, %v1003
          %v1005 = vpop.f32.mrf.mxu0
          %1006 = vmatprep.mubr.f32.mxu0 0.0
          %1007 = vmatmul.mubr.f32.gmra.mxu0 %v879
          %v1008 = vpop.f32.mrf.mxu0
          %v1009 = vadd.f32 %v910, %v1008
          %v1010 = vpop.f32.mrf.mxu0
          %1011 = vmatprep.mubr.f32.mxu0 0.0
          %1012 = vmatmul.mubr.f32.gmra.mxu0 %v880
          %v1013 = vpop.f32.mrf.mxu0
          %v1014 = vadd.f32 %v910, %v1013
          %v1015 = vpop.f32.mrf.mxu0
          %1016 = vmatprep.mubr.f32.mxu0 0.0
          %1017 = vmatmul.mubr.f32.gmra.mxu0 %v881
          %v1018 = vpop.f32.mrf.mxu0
          %v1019 = vadd.f32 %v910, %v1018
          %v1020 = vpop.f32.mrf.mxu0
          %1021 = vmatprep.mubr.f32.mxu0 0.0
          %1022 = vmatmul.mubr.f32.gmra.mxu0 %v882
          %v1023 = vpop.f32.mrf.mxu0
          %v1024 = vadd.f32 %v910, %v1023
          %v1025 = vpop.f32.mrf.mxu0
          %1026 = vmatprep.mubr.f32.mxu0 0.0
          %1027 = vmatmul.mubr.f32.gmra.mxu0 %v883
          %v1028 = vpop.f32.mrf.mxu0
          %v1029 = vadd.f32 %v910, %v1028
          %v1030 = vpop.f32.mrf.mxu0
          %1031 = vmatprep.mubr.f32.mxu0 0.0
          %1032 = vmatmul.mubr.f32.gmra.mxu0 %v884
          %v1033 = vpop.f32.mrf.mxu0
          %v1034 = vadd.f32 %v910, %v1033
          %v1035 = vpop.f32.mrf.mxu0
          %1036 = vmatprep.mubr.f32.mxu0 0.0
          %1037 = vmatmul.mubr.f32.gmra.mxu0 %v885
          %v1038 = vpop.f32.mrf.mxu0
          %v1039 = vadd.f32 %v910, %v1038
          %v1040 = vpop.f32.mrf.mxu0
          %1041 = vmatprep.mubr.f32.mxu0 0.0
          %1042 = vmatmul.mubr.f32.gmra.mxu0 %v886
          %v1043 = vpop.f32.mrf.mxu0
          %v1044 = vadd.f32 %v910, %v1043
          %v1045 = vpop.f32.mrf.mxu0
          %1046 = vmatprep.mubr.f32.mxu0 0.0
          %1047 = vmatmul.mubr.f32.gmra.mxu0 %v887
          %v1048 = vpop.f32.mrf.mxu0
          %v1049 = vadd.f32 %v910, %v1048
          %v1050 = vpop.f32.mrf.mxu0
          %1051 = vmatprep.mubr.f32.mxu0 0.0
          %1052 = vmatmul.mubr.f32.gmra.mxu0 %v888
          %v1053 = vpop.f32.mrf.mxu0
          %v1054 = vadd.f32 %v910, %v1053
          %v1055 = vpop.f32.mrf.mxu0
          %1056 = vdwg.mxu0
          %v1057 = vmax.f32 %v979, 0.0
          %v1058 = vmax.f32 %v984, 0.0
          %v1059 = vmax.f32 %v989, 0.0
          %v1060 = vmax.f32 %v994, 0.0
          %v1061 = vmax.f32 %v999, 0.0
          %v1062 = vmax.f32 %v1004, 0.0
          %v1063 = vmax.f32 %v1009, 0.0
          %v1064 = vmax.f32 %v1014, 0.0
          %v1065 = vmax.f32 %v1019, 0.0
          %v1066 = vmax.f32 %v1024, 0.0
          %v1067 = vmax.f32 %v1029, 0.0
          %v1068 = vmax.f32 %v1034, 0.0
          %v1069 = vmax.f32 %v1039, 0.0
          %v1070 = vmax.f32 %v1044, 0.0
          %v1071 = vmax.f32 %v1049, 0.0
          %v1072 = vmax.f32 %v1054, 0.0
          %v1073 = vld [vmem:[#allocation8] sm:$0xff]
          %v1074 = vld [vmem:[#allocation8 + $0x8] sm:$0xff]
          %v1075 = vld [vmem:[#allocation8 + $0x10] sm:$0xff]
          %v1076 = vld [vmem:[#allocation8 + $0x18] sm:$0xff]
          %v1077 = vld [vmem:[#allocation8 + $0x20] sm:$0xff]
          %v1078 = vld [vmem:[#allocation8 + $0x28] sm:$0xff]
          %v1079 = vld [vmem:[#allocation8 + $0x30] sm:$0xff]
          %v1080 = vld [vmem:[#allocation8 + $0x38] sm:$0xff]
          %v1081 = vld [vmem:[#allocation8 + $0x40] sm:$0xff]
          %v1082 = vld [vmem:[#allocation8 + $0x48] sm:$0xff]
          %v1083 = vld [vmem:[#allocation8 + $0x50] sm:$0xff]
          %v1084 = vld [vmem:[#allocation8 + $0x58] sm:$0xff]
          %v1085 = vld [vmem:[#allocation8 + $0x60] sm:$0xff]
          %v1086 = vld [vmem:[#allocation8 + $0x68] sm:$0xff]
          %v1087 = vld [vmem:[#allocation8 + $0x70] sm:$0xff]
          %v1088 = vld [vmem:[#allocation8 + $0x78] sm:$0xff]
          %v1089 = vld [vmem:[%s6] sm:$0x1]
          %v1091 = vlaneseq
          %v1092 = vshrl.u32 %v1091, 7
          %v1093 = vsub.s32 0, %v1092
          %v1094 = vrot.slane %v1089, %v1093
          %1096 = vmatprep.subr.mxu0 0.0
          %1097 = vmatpush1.msra.mxu0 %v1088
          %1098 = vmatprep.subr.mxu0 0.0
          %1099 = vmatpush1.msra.mxu0 %v1087
          %1100 = vmatprep.subr.mxu0 0.0
          %1101 = vmatpush1.msra.mxu0 %v1086
          %1102 = vmatprep.subr.mxu0 0.0
          %1103 = vmatpush1.msra.mxu0 %v1085
          %1104 = vmatprep.subr.mxu0 0.0
          %1105 = vmatpush1.msra.mxu0 %v1084
          %1106 = vmatprep.subr.mxu0 0.0
          %1107 = vmatpush1.msra.mxu0 %v1083
          %1108 = vmatprep.subr.mxu0 0.0
          %1109 = vmatpush1.msra.mxu0 %v1082
          %1110 = vmatprep.subr.mxu0 0.0
          %1111 = vmatpush1.msra.mxu0 %v1081
          %1112 = vmatprep.subr.mxu0 0.0
          %1113 = vmatpush1.msra.mxu0 %v1080
          %1114 = vmatprep.subr.mxu0 0.0
          %1115 = vmatpush1.msra.mxu0 %v1079
          %1116 = vmatprep.subr.mxu0 0.0
          %1117 = vmatpush1.msra.mxu0 %v1078
          %1118 = vmatprep.subr.mxu0 0.0
          %1119 = vmatpush1.msra.mxu0 %v1077
          %1120 = vmatprep.subr.mxu0 0.0
          %1121 = vmatpush1.msra.mxu0 %v1076
          %1122 = vmatprep.subr.mxu0 0.0
          %1123 = vmatpush1.msra.mxu0 %v1075
          %1124 = vmatprep.subr.mxu0 0.0
          %1125 = vmatpush1.msra.mxu0 %v1074
          %1126 = vmatprep.subr.mxu0 0.0
          %1127 = vmatpush1.msra.mxu0 %v1073
          %1128 = vmatprep.subr.mxu0 0.0
          %1129 = vmatpush2.msra.mxu0 0.0
          %1130 = vmatprep.subr.mxu0 0.0
          %1131 = vmatpush2.msra.mxu0 0.0
          %1132 = vmatprep.subr.mxu0 0.0
          %1133 = vmatpush2.msra.mxu0 0.0
          %1134 = vmatprep.subr.mxu0 0.0
          %1135 = vmatpush2.msra.mxu0 0.0
          %1136 = vmatprep.subr.mxu0 0.0
          %1137 = vmatpush2.msra.mxu0 0.0
          %1138 = vmatprep.subr.mxu0 0.0
          %1139 = vmatpush2.msra.mxu0 0.0
          %1140 = vmatprep.subr.mxu0 0.0
          %1141 = vmatpush2.msra.mxu0 0.0
          %1142 = vmatprep.subr.mxu0 0.0
          %1143 = vmatpush2.msra.mxu0 0.0
          %1144 = vmatprep.subr.mxu0 0.0
          %1145 = vmatpush2.msra.mxu0 0.0
          %1146 = vmatprep.subr.mxu0 0.0
          %1147 = vmatpush2.msra.mxu0 0.0
          %1148 = vmatprep.subr.mxu0 0.0
          %1149 = vmatpush2.msra.mxu0 0.0
          %1150 = vmatprep.subr.mxu0 0.0
          %1151 = vmatpush2.msra.mxu0 0.0
          %1152 = vmatprep.subr.mxu0 0.0
          %1153 = vmatpush2.msra.mxu0 0.0
          %1154 = vmatprep.subr.mxu0 0.0
          %1155 = vmatpush2.msra.mxu0 0.0
          %1156 = vmatprep.subr.mxu0 0.0
          %1157 = vmatpush2.msra.mxu0 0.0
          %1158 = vmatprep.subr.mxu0 0.0
          %1159 = vmatpush2.msra.mxu0 0.0
          %1160 = vmatprep.mubr.f32.mxu0 0.0
          %1161 = vmatmul.mubr.f32.gmra.mxu0 %v1057
          %v1162 = vpop.f32.mrf.mxu0
          %v1163 = vadd.f32 %v1094, %v1162
          %v1164 = vpop.f32.mrf.mxu0
          %1165 = vmatprep.mubr.f32.mxu0 0.0
          %1166 = vmatmul.mubr.f32.gmra.mxu0 %v1058
          %v1167 = vpop.f32.mrf.mxu0
          %v1168 = vadd.f32 %v1094, %v1167
          %v1169 = vpop.f32.mrf.mxu0
          %1170 = vmatprep.mubr.f32.mxu0 0.0
          %1171 = vmatmul.mubr.f32.gmra.mxu0 %v1059
          %v1172 = vpop.f32.mrf.mxu0
          %v1173 = vadd.f32 %v1094, %v1172
          %v1174 = vpop.f32.mrf.mxu0
          %1175 = vmatprep.mubr.f32.mxu0 0.0
          %1176 = vmatmul.mubr.f32.gmra.mxu0 %v1060
          %v1177 = vpop.f32.mrf.mxu0
          %v1178 = vadd.f32 %v1094, %v1177
          %v1179 = vpop.f32.mrf.mxu0
          %1180 = vmatprep.mubr.f32.mxu0 0.0
          %1181 = vmatmul.mubr.f32.gmra.mxu0 %v1061
          %v1182 = vpop.f32.mrf.mxu0
          %v1183 = vadd.f32 %v1094, %v1182
          %v1184 = vpop.f32.mrf.mxu0
          %1185 = vmatprep.mubr.f32.mxu0 0.0
          %1186 = vmatmul.mubr.f32.gmra.mxu0 %v1062
          %v1187 = vpop.f32.mrf.mxu0
          %v1188 = vadd.f32 %v1094, %v1187
          %v1189 = vpop.f32.mrf.mxu0
          %1190 = vmatprep.mubr.f32.mxu0 0.0
          %1191 = vmatmul.mubr.f32.gmra.mxu0 %v1063
          %v1192 = vpop.f32.mrf.mxu0
          %v1193 = vadd.f32 %v1094, %v1192
          %v1194 = vpop.f32.mrf.mxu0
          %1195 = vmatprep.mubr.f32.mxu0 0.0
          %1196 = vmatmul.mubr.f32.gmra.mxu0 %v1064
          %v1197 = vpop.f32.mrf.mxu0
          %v1198 = vadd.f32 %v1094, %v1197
          %v1199 = vpop.f32.mrf.mxu0
          %1200 = vmatprep.mubr.f32.mxu0 0.0
          %1201 = vmatmul.mubr.f32.gmra.mxu0 %v1065
          %v1202 = vpop.f32.mrf.mxu0
          %v1203 = vadd.f32 %v1094, %v1202
          %v1204 = vpop.f32.mrf.mxu0
          %1205 = vmatprep.mubr.f32.mxu0 0.0
          %1206 = vmatmul.mubr.f32.gmra.mxu0 %v1066
          %v1207 = vpop.f32.mrf.mxu0
          %v1208 = vadd.f32 %v1094, %v1207
          %v1209 = vpop.f32.mrf.mxu0
          %1210 = vmatprep.mubr.f32.mxu0 0.0
          %1211 = vmatmul.mubr.f32.gmra.mxu0 %v1067
          %v1212 = vpop.f32.mrf.mxu0
          %v1213 = vadd.f32 %v1094, %v1212
          %v1214 = vpop.f32.mrf.mxu0
          %1215 = vmatprep.mubr.f32.mxu0 0.0
          %1216 = vmatmul.mubr.f32.gmra.mxu0 %v1068
          %v1217 = vpop.f32.mrf.mxu0
          %v1218 = vadd.f32 %v1094, %v1217
          %v1219 = vpop.f32.mrf.mxu0
          %1220 = vmatprep.mubr.f32.mxu0 0.0
          %1221 = vmatmul.mubr.f32.gmra.mxu0 %v1069
          %v1222 = vpop.f32.mrf.mxu0
          %v1223 = vadd.f32 %v1094, %v1222
          %v1224 = vpop.f32.mrf.mxu0
          %1225 = vmatprep.mubr.f32.mxu0 0.0
          %1226 = vmatmul.mubr.f32.gmra.mxu0 %v1070
          %v1227 = vpop.f32.mrf.mxu0
          %v1228 = vadd.f32 %v1094, %v1227
          %v1229 = vpop.f32.mrf.mxu0
          %1230 = vmatprep.mubr.f32.mxu0 0.0
          %1231 = vmatmul.mubr.f32.gmra.mxu0 %v1071
          %v1232 = vpop.f32.mrf.mxu0
          %v1233 = vadd.f32 %v1094, %v1232
          %v1234 = vpop.f32.mrf.mxu0
          %1235 = vmatprep.mubr.f32.mxu0 0.0
          %1236 = vmatmul.mubr.f32.gmra.mxu0 %v1072
          %v1237 = vpop.f32.mrf.mxu0
          %v1238 = vadd.f32 %v1094, %v1237
          %v1239 = vpop.f32.mrf.mxu0
          %1240 = vdwg.mxu0
          %v1241 = vmax.f32 %v1163, 0.0
          %v1242 = vmax.f32 %v1168, 0.0
          %v1243 = vmax.f32 %v1173, 0.0
          %v1244 = vmax.f32 %v1178, 0.0
          %v1245 = vmax.f32 %v1183, 0.0
          %v1246 = vmax.f32 %v1188, 0.0
          %v1247 = vmax.f32 %v1193, 0.0
          %v1248 = vmax.f32 %v1198, 0.0
          %v1249 = vmax.f32 %v1203, 0.0
          %v1250 = vmax.f32 %v1208, 0.0
          %v1251 = vmax.f32 %v1213, 0.0
          %v1252 = vmax.f32 %v1218, 0.0
          %v1253 = vmax.f32 %v1223, 0.0
          %v1254 = vmax.f32 %v1228, 0.0
          %v1255 = vmax.f32 %v1233, 0.0
          %v1256 = vmax.f32 %v1238, 0.0
          %1257 = vst [vmem:[%s446] sm:$0xff] %v873
          %1258 = vst [vmem:[%s446 + $0x8] sm:$0xff] %v874
          %1259 = vst [vmem:[%s446 + $0x10] sm:$0xff] %v875
          %1260 = vst [vmem:[%s446 + $0x18] sm:$0xff] %v876
          %1261 = vst [vmem:[%s446 + $0x20] sm:$0xff] %v877
          %1262 = vst [vmem:[%s446 + $0x28] sm:$0xff] %v878
          %1263 = vst [vmem:[%s446 + $0x30] sm:$0xff] %v879
          %1264 = vst [vmem:[%s446 + $0x38] sm:$0xff] %v880
          %1265 = vst [vmem:[%s446 + $0x40] sm:$0xff] %v881
          %1266 = vst [vmem:[%s446 + $0x48] sm:$0xff] %v882
          %1267 = vst [vmem:[%s446 + $0x50] sm:$0xff] %v883
          %1268 = vst [vmem:[%s446 + $0x58] sm:$0xff] %v884
          %1269 = vst [vmem:[%s446 + $0x60] sm:$0xff] %v885
          %1270 = vst [vmem:[%s446 + $0x68] sm:$0xff] %v886
          %1271 = vst [vmem:[%s446 + $0x70] sm:$0xff] %v887
          %1272 = vst [vmem:[%s446 + $0x78] sm:$0xff] %v888
          %1273 = vst [vmem:[%s453] sm:$0xff] %v1241
          %1274 = vst [vmem:[%s453 + $0x8] sm:$0xff] %v1242
          %1275 = vst [vmem:[%s453 + $0x10] sm:$0xff] %v1243
          %1276 = vst [vmem:[%s453 + $0x18] sm:$0xff] %v1244
          %1277 = vst [vmem:[%s453 + $0x20] sm:$0xff] %v1245
          %1278 = vst [vmem:[%s453 + $0x28] sm:$0xff] %v1246
          %1279 = vst [vmem:[%s453 + $0x30] sm:$0xff] %v1247
          %1280 = vst [vmem:[%s453 + $0x38] sm:$0xff] %v1248
          %1281 = vst [vmem:[%s453 + $0x40] sm:$0xff] %v1249
          %1282 = vst [vmem:[%s453 + $0x48] sm:$0xff] %v1250
          %1283 = vst [vmem:[%s453 + $0x50] sm:$0xff] %v1251
          %1284 = vst [vmem:[%s453 + $0x58] sm:$0xff] %v1252
          %1285 = vst [vmem:[%s453 + $0x60] sm:$0xff] %v1253
          %1286 = vst [vmem:[%s453 + $0x68] sm:$0xff] %v1254
          %1287 = vst [vmem:[%s453 + $0x70] sm:$0xff] %v1255
          %1288 = vst [vmem:[%s453 + $0x78] sm:$0xff] %v1256
          %v1289 = vlaneseq
          %v1290 = vshrl.u32 %v1289, 7
          %v1291 = vadd.s32 %v1290, 8
          %v1292 = vadd.s32 %v1290, 16
          %v1293 = vadd.s32 %v1290, 24
          %v1294 = vadd.s32 %v1290, 32
          %v1295 = vadd.s32 %v1290, 40
          %v1296 = vadd.s32 %v1290, 48
          %v1297 = vadd.s32 %v1290, 56
          %v1298 = vadd.s32 %v1290, 64
          %v1299 = vadd.s32 %v1290, 72
          %v1300 = vadd.s32 %v1290, 80
          %v1301 = vadd.s32 %v1290, 88
          %v1302 = vadd.s32 %v1290, 96
          %v1303 = vadd.s32 %v1290, 104
          %v1304 = vadd.s32 %v1290, 112
          %v1305 = vadd.s32 %v1290, 120
          %v1306 = vstv %s478
          %v1307 = vadd.s32 %v1306, %v1290
          %v1308 = vadd.s32 %v1306, %v1291
          %v1309 = vadd.s32 %v1306, %v1292
          %v1310 = vadd.s32 %v1306, %v1293
          %v1311 = vadd.s32 %v1306, %v1294
          %v1312 = vadd.s32 %v1306, %v1295
          %v1313 = vadd.s32 %v1306, %v1296
          %v1314 = vadd.s32 %v1306, %v1297
          %v1315 = vadd.s32 %v1306, %v1298
          %v1316 = vadd.s32 %v1306, %v1299
          %v1317 = vadd.s32 %v1306, %v1300
          %v1318 = vadd.s32 %v1306, %v1301
          %v1319 = vadd.s32 %v1306, %v1302
          %v1320 = vadd.s32 %v1306, %v1303
          %v1321 = vadd.s32 %v1306, %v1304
          %v1322 = vadd.s32 %v1306, %v1305
          %vm1323 = vcmp.lt.s32.totalorder %v1307, 200
          %vm1324 = vcmp.lt.s32.totalorder %v1308, 200
          %vm1325 = vcmp.lt.s32.totalorder %v1309, 200
          %vm1326 = vcmp.lt.s32.totalorder %v1310, 200
          %vm1327 = vcmp.lt.s32.totalorder %v1311, 200
          %vm1328 = vcmp.lt.s32.totalorder %v1312, 200
          %vm1329 = vcmp.lt.s32.totalorder %v1313, 200
          %vm1330 = vcmp.lt.s32.totalorder %v1314, 200
          %vm1331 = vcmp.lt.s32.totalorder %v1315, 200
          %vm1332 = vcmp.lt.s32.totalorder %v1316, 200
          %vm1333 = vcmp.lt.s32.totalorder %v1317, 200
          %vm1334 = vcmp.lt.s32.totalorder %v1318, 200
          %vm1335 = vcmp.lt.s32.totalorder %v1319, 200
          %vm1336 = vcmp.lt.s32.totalorder %v1320, 200
          %vm1337 = vcmp.lt.s32.totalorder %v1321, 200
          %vm1338 = vcmp.lt.s32.totalorder %v1322, 200
          %v1339 = vsel %vm1323, 1, 0
          %v1340 = vsel %vm1324, 1, 0
          %v1341 = vsel %vm1325, 1, 0
          %v1342 = vsel %vm1326, 1, 0
          %v1343 = vsel %vm1327, 1, 0
          %v1344 = vsel %vm1328, 1, 0
          %v1345 = vsel %vm1329, 1, 0
          %v1346 = vsel %vm1330, 1, 0
          %v1347 = vsel %vm1331, 1, 0
          %v1348 = vsel %vm1332, 1, 0
          %v1349 = vsel %vm1333, 1, 0
          %v1350 = vsel %vm1334, 1, 0
          %v1351 = vsel %vm1335, 1, 0
          %v1352 = vsel %vm1336, 1, 0
          %v1353 = vsel %vm1337, 1, 0
          %v1354 = vsel %vm1338, 1, 0
          %v1355 = vcvt.s32.f32 %v1339
          %v1356 = vcvt.s32.f32 %v1340
          %v1357 = vcvt.s32.f32 %v1341
          %v1358 = vcvt.s32.f32 %v1342
          %v1359 = vcvt.s32.f32 %v1343
          %v1360 = vcvt.s32.f32 %v1344
          %v1361 = vcvt.s32.f32 %v1345
          %v1362 = vcvt.s32.f32 %v1346
          %v1363 = vcvt.s32.f32 %v1347
          %v1364 = vcvt.s32.f32 %v1348
          %v1365 = vcvt.s32.f32 %v1349
          %v1366 = vcvt.s32.f32 %v1350
          %v1367 = vcvt.s32.f32 %v1351
          %v1368 = vcvt.s32.f32 %v1352
          %v1369 = vcvt.s32.f32 %v1353
          %v1370 = vcvt.s32.f32 %v1354
          %v1371 = vmul.f32 %v1241, %v1355
          %v1372 = vmul.f32 %v1242, %v1356
          %v1373 = vmul.f32 %v1243, %v1357
          %v1374 = vmul.f32 %v1244, %v1358
          %v1375 = vmul.f32 %v1245, %v1359
          %v1376 = vmul.f32 %v1246, %v1360
          %v1377 = vmul.f32 %v1247, %v1361
          %v1378 = vmul.f32 %v1248, %v1362
          %v1379 = vmul.f32 %v1249, %v1363
          %v1380 = vmul.f32 %v1250, %v1364
          %v1381 = vmul.f32 %v1251, %v1365
          %v1382 = vmul.f32 %v1252, %v1366
          %v1383 = vmul.f32 %v1253, %v1367
          %v1384 = vmul.f32 %v1254, %v1368
          %v1385 = vmul.f32 %v1255, %v1369
          %v1386 = vmul.f32 %v1256, %v1370
          %v1387 = vadd.f32 %v1371, %v1372
          %v1388 = vadd.f32 %v1387, %v1373
          %v1389 = vadd.f32 %v1388, %v1374
          %v1390 = vadd.f32 %v1389, %v1375
          %v1391 = vadd.f32 %v1390, %v1376
          %v1392 = vadd.f32 %v1391, %v1377
          %v1393 = vadd.f32 %v1392, %v1378
          %v1394 = vadd.f32 %v1393, %v1379
          %v1395 = vadd.f32 %v1394, %v1380
          %v1396 = vadd.f32 %v1395, %v1381
          %v1397 = vadd.f32 %v1396, %v1382
          %v1398 = vadd.f32 %v1397, %v1383
          %v1399 = vadd.f32 %v1398, %v1384
          %v1400 = vadd.f32 %v1399, %v1385
          %v1401 = vadd.f32 %v1400, %v1386
          %v1402 = vrot.slane %v1401, 4
          %v1403 = vadd.f32 %v1401, %v1402
          %v1404 = vrot.slane %v1403, 2
          %v1405 = vadd.f32 %v1403, %v1404
          %v1406 = vrot.slane %v1405, 1
          %v1407 = vadd.f32 %v1405, %v1406
          %v1408 = vmul.f32 %v1371, %v1241
          %v1409 = vmul.f32 %v1372, %v1242
          %v1410 = vmul.f32 %v1373, %v1243
          %v1411 = vmul.f32 %v1374, %v1244
          %v1412 = vmul.f32 %v1375, %v1245
          %v1413 = vmul.f32 %v1376, %v1246
          %v1414 = vmul.f32 %v1377, %v1247
          %v1415 = vmul.f32 %v1378, %v1248
          %v1416 = vmul.f32 %v1379, %v1249
          %v1417 = vmul.f32 %v1380, %v1250
          %v1418 = vmul.f32 %v1381, %v1251
          %v1419 = vmul.f32 %v1382, %v1252
          %v1420 = vmul.f32 %v1383, %v1253
          %v1421 = vmul.f32 %v1384, %v1254
          %v1422 = vmul.f32 %v1385, %v1255
          %v1423 = vmul.f32 %v1386, %v1256
          %v1424 = vadd.f32 %v1408, %v1409
          %v1425 = vadd.f32 %v1424, %v1410
          %v1426 = vadd.f32 %v1425, %v1411
          %v1427 = vadd.f32 %v1426, %v1412
          %v1428 = vadd.f32 %v1427, %v1413
          %v1429 = vadd.f32 %v1428, %v1414
          %v1430 = vadd.f32 %v1429, %v1415
          %v1431 = vadd.f32 %v1430, %v1416
          %v1432 = vadd.f32 %v1431, %v1417
          %v1433 = vadd.f32 %v1432, %v1418
          %v1434 = vadd.f32 %v1433, %v1419
          %v1435 = vadd.f32 %v1434, %v1420
          %v1436 = vadd.f32 %v1435, %v1421
          %v1437 = vadd.f32 %v1436, %v1422
          %v1438 = vadd.f32 %v1437, %v1423
          %v1439 = vrot.slane %v1438, 4
          %v1440 = vadd.f32 %v1438, %v1439
          %v1441 = vrot.slane %v1440, 2
          %v1442 = vadd.f32 %v1440, %v1441
          %v1443 = vrot.slane %v1442, 1
          %v1444 = vadd.f32 %v1442, %v1443
          %vm1445 = vcmp.eq.s32.totalorder %v1290, 0
          %v1446 = vsel %vm1445, 1, 0
          %vm1447 = vcmp.eq.s32.totalorder %v1446, 1
          %v1448 = vsel %vm1447, %v1407, 0.0
          %1449 = vst [vmem:[%s460] sm:$0xff] %v1448
          %v1450 = vsel %vm1447, %v1444, 0.0
          %1451 = vst [vmem:[%s467] sm:$0xff] %v1450
        $region68: #{tpu_custom_call.1} parent=47 // pred_fallthru
          _
        %s1452 = sand.u32 %s214, 1
        %s1453 = scalar_lea.sflag [#allocation5], %s1452
        %s1454 = sand.u32 %s214, 1
        %s1455 = smul.addr %s1454, 128
        %s1456 = scalar_lea.vmem [#allocation9], %s1455
        %s1457 = sand.u32 %s35, 1
        %s1458 = scalar_lea.sflag [#allocation11], %s1457
        %s1459 = sand.u32 %s240, 1
        %s1460 = smul.addr %s1459, 128
        %s1461 = scalar_lea.vmem [#allocation10], %s1460
        %s1462 = sand.u32 %s35, 1
        %s1463 = scalar_lea.sflag [#allocation11], %s1462
        %s1464 = sand.u32 %s266, 1
        %s1465 = smul.addr %s1464, 8
        %s1466 = scalar_lea.vmem [#allocation12], %s1465
        %s1467 = sand.u32 %s292, 1
        %s1468 = scalar_lea.sflag [#allocation14], %s1467
        %s1469 = sand.u32 %s292, 1
        %s1470 = smul.addr %s1469, 8
        %s1471 = scalar_lea.vmem [#allocation13], %s1470
        // Predicated region
        $region69: #{tpu_custom_call.1} parent=47 // pred_check
          %p1472 = pneg %p224
        $region70: #{tpu_custom_call.1} parent=47 // pred_check_branch
          %1474 = sbr.rel (%p1472) target = $region72
        $region71: #{tpu_custom_call.1} parent=47 // pred_region
          %s1475 = smul.u32 16, %s39
          %s1477 = ssub.s32 2048, 2048
          %1478 = vsyncadd %s1453, %s1477
          %s1479 = smul.addr %s1475, 128
          %s1480 = scalar_lea.hbm %s7, %s1479
          %s1481 = sshll.u32 %s1456, 4
          %s1482 = int_to_ptr.vmem [resolvable:$true] %s1481
          %1487 = dma.vmem_to_hbm [thread:$0]  %s1482, 2048, %s1480, %s1453, 128, 128, 8
        $region72: #{tpu_custom_call.1} parent=47 // pred_fallthru
          _
        // Predicated region
        $region73: #{tpu_custom_call.1} parent=47 // pred_check
          %p1488 = pneg %p250
        $region74: #{tpu_custom_call.1} parent=47 // pred_check_branch
          %1490 = sbr.rel (%p1488) target = $region76
        $region75: #{tpu_custom_call.1} parent=47 // pred_region
          %s1491 = smul.u32 16, %s39
          %s1493 = ssub.s32 2048, 2048
          %1494 = vsyncadd %s1458, %s1493
          %s1495 = smul.addr %s1491, 128
          %s1496 = scalar_lea.hbm %s8, %s1495
          %s1497 = sshll.u32 %s1461, 4
          %s1498 = int_to_ptr.vmem [resolvable:$true] %s1497
          %1503 = dma.vmem_to_hbm [thread:$0]  %s1498, 2048, %s1496, %s1458, 128, 128, 8
        $region76: #{tpu_custom_call.1} parent=47 // pred_fallthru
          _
        // Predicated region
        $region77: #{tpu_custom_call.1} parent=47 // pred_check
          %p1504 = pneg %p276
        $region78: #{tpu_custom_call.1} parent=47 // pred_check_branch
          %1506 = sbr.rel (%p1504) target = $region80
        $region79: #{tpu_custom_call.1} parent=47 // pred_region
          %s1508 = ssub.s32 128, 128
          %1509 = vsyncadd %s1463, %s1508
          %s1510 = smul.addr %s39, 128
          %s1511 = scalar_lea.hbm %s9, %s1510
          %s1513 = sshll.u32 %s1466, 4
          %s1514 = int_to_ptr.vmem [resolvable:$true] %s1513
          %1516 = dma.vmem_to_hbm [thread:$0]  %s1514, 128, %s1511, %s1463
        $region80: #{tpu_custom_call.1} parent=47 // pred_fallthru
          _
        // Predicated region
        $region81: #{tpu_custom_call.1} parent=47 // pred_check
          %p1517 = pneg %p302
        $region82: #{tpu_custom_call.1} parent=47 // pred_check_branch
          %1519 = sbr.rel (%p1517) target = $region84
        $region83: #{tpu_custom_call.1} parent=47 // pred_region
          %s1521 = ssub.s32 128, 128
          %1522 = vsyncadd %s1468, %s1521
          %s1523 = smul.addr %s39, 128
          %s1524 = scalar_lea.hbm %s10, %s1523
          %s1526 = sshll.u32 %s1471, 4
          %s1527 = int_to_ptr.vmem [resolvable:$true] %s1526
          %1529 = dma.vmem_to_hbm [thread:$0]  %s1527, 128, %s1524, %s1468
        $region84: #{tpu_custom_call.1} parent=47 // pred_fallthru
          _
      $region48: #{tpu_custom_call.1} parent=5 // pred_fallthru
        _
      %p1530 = scmp.le.s32.totalorder 2, %s30
      // Predicated region
      $region85: #{tpu_custom_call.1} parent=5 // pred_check
        %p1531 = pneg %p1530
      $region86: #{tpu_custom_call.1} parent=5 // pred_check_branch
        %1533 = sbr.rel (%p1531) target = $region88
      $region87: #{tpu_custom_call.1} parent=5 // pred_region
        %s1534 = ssub.s32 %s30, 2
        // Predicated region
        $region89: #{tpu_custom_call.1} parent=87 // pred_check
          %p1535 = pneg %p230
        $region90: #{tpu_custom_call.1} parent=87 // pred_check_branch
          %1537 = sbr.rel (%p1535) target = $region92
        $region91: #{tpu_custom_call.1} parent=87 // pred_region
          %s1538 = sand.u32 %s215, 1
          %s1539 = scalar_lea.sflag [#allocation5], %s1538
          %s1540 = sand.u32 %s215, 1
          %s1541 = smul.addr %s1540, 128
          %s1542 = scalar_lea.vmem [#allocation9], %s1541
          %1543 = dma.done %s1539, 2048
        $region92: #{tpu_custom_call.1} parent=87 // pred_fallthru
          _
        // Predicated region
        $region93: #{tpu_custom_call.1} parent=87 // pred_check
          %p1544 = pneg %p256
        $region94: #{tpu_custom_call.1} parent=87 // pred_check_branch
          %1546 = sbr.rel (%p1544) target = $region96
        $region95: #{tpu_custom_call.1} parent=87 // pred_region
          %s1547 = sand.u32 %s36, 1
          %s1548 = scalar_lea.sflag [#allocation11], %s1547
          %s1549 = sand.u32 %s241, 1
          %s1550 = smul.addr %s1549, 128
          %s1551 = scalar_lea.vmem [#allocation10], %s1550
          %1552 = dma.done %s1548, 2048
        $region96: #{tpu_custom_call.1} parent=87 // pred_fallthru
          _
        // Predicated region
        $region97: #{tpu_custom_call.1} parent=87 // pred_check
          %p1553 = pneg %p282
        $region98: #{tpu_custom_call.1} parent=87 // pred_check_branch
          %1555 = sbr.rel (%p1553) target = $region100
        $region99: #{tpu_custom_call.1} parent=87 // pred_region
          %s1556 = sand.u32 %s36, 1
          %s1557 = scalar_lea.sflag [#allocation11], %s1556
          %s1558 = sand.u32 %s267, 1
          %s1559 = smul.addr %s1558, 8
          %s1560 = scalar_lea.vmem [#allocation12], %s1559
          %1561 = dma.done %s1557, 128
        $region100: #{tpu_custom_call.1} parent=87 // pred_fallthru
          _
        // Predicated region
        $region101: #{tpu_custom_call.1} parent=87 // pred_check
          %p1562 = pneg %p308
        $region102: #{tpu_custom_call.1} parent=87 // pred_check_branch
          %1564 = sbr.rel (%p1562) target = $region104
        $region103: #{tpu_custom_call.1} parent=87 // pred_region
          %s1565 = sand.u32 %s293, 1
          %s1566 = scalar_lea.sflag [#allocation14], %s1565
          %s1567 = sand.u32 %s293, 1
          %s1568 = smul.addr %s1567, 8
          %s1569 = scalar_lea.vmem [#allocation13], %s1568
          %1570 = dma.done %s1566, 128
        $region104: #{tpu_custom_call.1} parent=87 // pred_fallthru
          _
      $region88: #{tpu_custom_call.1} parent=5 // pred_fallthru
        _
    $region6: #{tpu_custom_call.1} parent=1 // loop_footer
      %s34 = sadd.s32 1, %s30
    $region7: #{tpu_custom_call.1} parent=1 // loop_footer_branch
      %29 = sbr.rel target = $region3
    $region8: #{tpu_custom_call.1} parent=1 // loop_exit
      _
    %1571 = vsyncpa [#allocation4], 1
    %s1572 = scalar_lea.sflag [#allocation4], 1
    %1573 = vsyncpa %s1572, 1
    %1574 = vsyncpa [#allocation7], 1
    %1575 = vsyncpa [#allocation5], 1
    %s1576 = scalar_lea.sflag [#allocation5], 1
    %1577 = vsyncpa %s1576, 1
    %1578 = vsyncpa [#allocation11], 1
    %s1579 = scalar_lea.sflag [#allocation11], 1
    %1580 = vsyncpa %s1579, 1
    %1581 = vsyncpa [#allocation14], 1
    %s1582 = scalar_lea.sflag [#allocation14], 1
    %1583 = vsyncpa %s1582, 1

</llo_original>
